<compile_context>
chip_gen: v6e
topology: v6e:2x2x1
jax: 0.10.0
libtpu: 0.0.40
codegen_flags: <defaults>
</compile_context>

<pallas_src>
import jax
import jax.numpy as jnp
from jax.experimental import pallas as pl
from jax.experimental.pallas import tpu as pltpu


def _round_up(n, m):
    return ((n + m - 1) // m) * m


def _mlp_kernel(x_ref,
                w1_ref, b1_ref,
                w2_ref, b2_ref,
                w3_ref, b3_ref,
                w4_ref, b4_ref,
                o_ref):
    # x_ref is a (TB, 768) bf16 tile; all weights bf16, biases f32.
    x = x_ref[...]

    h = jnp.dot(x, w1_ref[...], preferred_element_type=jnp.float32) + b1_ref[...]
    h = jnp.maximum(h, 0.0)                       # ReLU; Dropout is identity in eval

    h = jnp.dot(h.astype(jnp.bfloat16), w2_ref[...],
                preferred_element_type=jnp.float32) + b2_ref[...]
    h = jnp.maximum(h, 0.0)

    h = jnp.dot(h.astype(jnp.bfloat16), w3_ref[...],
                preferred_element_type=jnp.float32) + b3_ref[...]
    h = jnp.maximum(h, 0.0)

    out = jnp.dot(h.astype(jnp.bfloat16), w4_ref[...],
                  preferred_element_type=jnp.float32) + b4_ref[...]
    o_ref[...] = out.astype(o_ref.dtype)          # lane-dense (TB, 128) store


def feature_fc_layer_for_diet(x, params, *, tb=512):
    """x: [B, 768] float32 (cast to bf16 internally). Returns [B, 8] float32."""
    B = x.shape[0]

    # Batch tile: large to amortize per-step grid overhead, but never larger than the
    # (8-rounded) batch itself.
    TB = min(tb, _round_up(B, 8))
    Bp = _round_up(B, TB)

    # Cast / pad inputs and parameters (outside the kernel).
    xb = x.astype(jnp.bfloat16)
    if Bp != B:
        xb = jnp.pad(xb, ((0, Bp - B), (0, 0)))

    w1 = params["w1"].astype(jnp.bfloat16)
    w2 = params["w2"].astype(jnp.bfloat16)
    w3 = params["w3"].astype(jnp.bfloat16)
    b1 = params["b1"].astype(jnp.float32)
    b2 = params["b2"].astype(jnp.float32)
    b3 = params["b3"].astype(jnp.float32)
    # Zero-pad the last layer to 128 output lanes (lane-dense output block).
    w4 = jnp.zeros((128, 128), jnp.bfloat16).at[:, :8].set(
        params["w4"].astype(jnp.bfloat16))
    b4 = jnp.zeros((1, 128), jnp.float32).at[:, :8].set(
        params["b4"].astype(jnp.float32))

    # Per-tile VMEM footprint (double-buffered x/out + resident params + f32 scratch).
    param_bytes = (w1.size + w2.size + w3.size + w4.size) * 2 \
                  + (b1.size + b2.size + b3.size + b4.size) * 4
    tile_bytes = 2 * TB * 768 * 2 + 2 * TB * 128 * 4 + TB * 512 * 4
    vmem_limit = int(min(max(2 * (tile_bytes + param_bytes), 8 << 20), 48 << 20))

    const2d = lambda shape: pl.BlockSpec(shape, lambda i: (0, 0))

    out_padded = pl.pallas_call(
        _mlp_kernel,
        out_shape=jax.ShapeDtypeStruct((Bp, 128), jnp.float32),
        grid=(Bp // TB,),
        in_specs=[
            pl.BlockSpec((TB, 768), lambda i: (i, 0)),   # x: batch-tiled
            const2d(w1.shape), const2d(b1.shape),        # params: VMEM-resident
            const2d(w2.shape), const2d(b2.shape),
            const2d(w3.shape), const2d(b3.shape),
            const2d(w4.shape), const2d(b4.shape),
        ],
        out_specs=pl.BlockSpec((TB, 128), lambda i: (i, 0)),
        compiler_params=pltpu.CompilerParams(
            dimension_semantics=("parallel",),
            vmem_limit_bytes=vmem_limit,
        ),
    )(xb, w1, b1, w2, b2, w3, b3, w4, b4)

    return out_padded[:B, :8]


def init_params(key):
    """Deterministic PyTorch-Linear-style init (uniform +/- 1/sqrt(fan_in))."""
    dims = [768, 512, 256, 128, 8]
    params = {}
    for i in range(4):
        fan_in, fan_out = dims[i], dims[i + 1]
        key, kw, kb = jax.random.split(key, 3)
        bound = 1.0 / (fan_in ** 0.5)
        # Stored as [in, out] so the kernel does x @ W directly.
        params[f"w{i+1}"] = jax.random.uniform(
            kw, (fan_in, fan_out), jnp.float32, -bound, bound)
        # Bias kept 2D (1, out) so it broadcasts cleanly over the batch tile.
        params[f"b{i+1}"] = jax.random.uniform(
            kb, (1, fan_out), jnp.float32, -bound, bound)
    return params


def _reference(x, params):
    """Pure-JAX f32 reference using the same bf16-quantized weights the kernel sees."""
    q = lambda w: w.astype(jnp.bfloat16).astype(jnp.float32)
    h = jnp.maximum(x @ q(params["w1"]) + params["b1"], 0.0)
    h = jnp.maximum(h @ q(params["w2"]) + params["b2"], 0.0)
    h = jnp.maximum(h @ q(params["w3"]) + params["b3"], 0.0)
    return h @ q(params["w4"]) + params["b4"]


if __name__ == "__main__":
    key = jax.random.PRNGKey(0)
    key, kx = jax.random.split(key)

    B = 8  # small batch
    x = jax.random.normal(kx, (B, 768), jnp.float32)
    params = init_params(key)

    out = feature_fc_layer_for_diet(x, params)
    out = jax.block_until_ready(out)

    ref = _reference(x, params)
    assert out.shape == (B, 8), out.shape
    # bf16 dot operands -> loosened tolerance vs the f32 reference.
    assert jnp.allclose(out, ref, atol=5e-2, rtol=5e-2), "mismatch vs pure-JAX reference"

    print("KERNEL_OK")
</pallas_src>

<mosaic_0001>
module attributes {stable_mosaic.version = 11 : i64} {
  func.func @_mlp_kernel(%arg0: i32, %arg1: memref<8x768xbf16, #tpu.memory_space<vmem>>, %arg2: memref<768x512xbf16, #tpu.memory_space<vmem>>, %arg3: memref<1x512xf32, #tpu.memory_space<vmem>>, %arg4: memref<512x256xbf16, #tpu.memory_space<vmem>>, %arg5: memref<1x256xf32, #tpu.memory_space<vmem>>, %arg6: memref<256x128xbf16, #tpu.memory_space<vmem>>, %arg7: memref<1x128xf32, #tpu.memory_space<vmem>>, %arg8: memref<128x128xbf16, #tpu.memory_space<vmem>>, %arg9: memref<1x128xf32, #tpu.memory_space<vmem>>, %arg10: memref<8x128xf32, #tpu.memory_space<vmem>>) attributes {dimension_semantics = [#tpu.dimension_semantics<parallel>], iteration_bounds = array<i64: 1>, scalar_prefetch = 0 : i64, scratch_operands = 0 : i64, tpu.core_type = #tpu.core_type<tc>, window_params = [{transform_indices = @transform_0, window_bounds = array<i64: 8, 768>}, {pipeline_mode = #tpu.pipeline_mode<synchronous>, transform_indices = @transform_1, window_bounds = array<i64: 768, 512>}, {pipeline_mode = #tpu.pipeline_mode<synchronous>, transform_indices = @transform_2, window_bounds = array<i64: 1, 512>}, {pipeline_mode = #tpu.pipeline_mode<synchronous>, transform_indices = @transform_3, window_bounds = array<i64: 512, 256>}, {pipeline_mode = #tpu.pipeline_mode<synchronous>, transform_indices = @transform_4, window_bounds = array<i64: 1, 256>}, {pipeline_mode = #tpu.pipeline_mode<synchronous>, transform_indices = @transform_5, window_bounds = array<i64: 256, 128>}, {pipeline_mode = #tpu.pipeline_mode<synchronous>, transform_indices = @transform_6, window_bounds = array<i64: 1, 128>}, {pipeline_mode = #tpu.pipeline_mode<synchronous>, transform_indices = @transform_7, window_bounds = array<i64: 128, 128>}, {pipeline_mode = #tpu.pipeline_mode<synchronous>, transform_indices = @transform_8, window_bounds = array<i64: 1, 128>}, {transform_indices = @transform_9, window_bounds = array<i64: 8, 128>}]} {
    %c0 = arith.constant 0 : index
    %c0_0 = arith.constant 0 : index
    %0 = vector.load %arg1[%c0, %c0_0] : memref<8x768xbf16, #tpu.memory_space<vmem>>, vector<8x768xbf16>
    %c0_1 = arith.constant 0 : index
    %c0_2 = arith.constant 0 : index
    %1 = vector.load %arg2[%c0_1, %c0_2] : memref<768x512xbf16, #tpu.memory_space<vmem>>, vector<768x512xbf16>
    %cst = arith.constant dense<0.000000e+00> : vector<8x512xf32>
    %2 = tpu.matmul %0, %1, %cst {dimension_numbers = #tpu.dot_dimension_numbers<[1], [0], [0], [1], [0, 0, 1, 1], [], []>} : vector<8x768xbf16>, vector<768x512xbf16>, vector<8x512xf32> -> vector<8x512xf32>
    %c0_3 = arith.constant 0 : index
    %c0_4 = arith.constant 0 : index
    %3 = vector.load %arg3[%c0_3, %c0_4] : memref<1x512xf32, #tpu.memory_space<vmem>>, vector<1x512xf32>
    %4 = vector.broadcast %3 : vector<1x512xf32> to vector<8x512xf32>
    %5 = arith.addf %2, %4 : vector<8x512xf32>
    %cst_5 = arith.constant 0.000000e+00 : f32
    %6 = vector.broadcast %cst_5 : f32 to vector<8x512xf32>
    %7 = arith.maximumf %5, %6 : vector<8x512xf32>
    %8 = arith.truncf %7 : vector<8x512xf32> to vector<8x512xbf16>
    %c0_6 = arith.constant 0 : index
    %c0_7 = arith.constant 0 : index
    %9 = vector.load %arg4[%c0_6, %c0_7] : memref<512x256xbf16, #tpu.memory_space<vmem>>, vector<512x256xbf16>
    %cst_8 = arith.constant dense<0.000000e+00> : vector<8x256xf32>
    %10 = tpu.matmul %8, %9, %cst_8 {dimension_numbers = #tpu.dot_dimension_numbers<[1], [0], [0], [1], [0, 0, 1, 1], [], []>} : vector<8x512xbf16>, vector<512x256xbf16>, vector<8x256xf32> -> vector<8x256xf32>
    %c0_9 = arith.constant 0 : index
    %c0_10 = arith.constant 0 : index
    %11 = vector.load %arg5[%c0_9, %c0_10] : memref<1x256xf32, #tpu.memory_space<vmem>>, vector<1x256xf32>
    %12 = vector.broadcast %11 : vector<1x256xf32> to vector<8x256xf32>
    %13 = arith.addf %10, %12 : vector<8x256xf32>
    %cst_11 = arith.constant 0.000000e+00 : f32
    %14 = vector.broadcast %cst_11 : f32 to vector<8x256xf32>
    %15 = arith.maximumf %13, %14 : vector<8x256xf32>
    %16 = arith.truncf %15 : vector<8x256xf32> to vector<8x256xbf16>
    %c0_12 = arith.constant 0 : index
    %c0_13 = arith.constant 0 : index
    %17 = vector.load %arg6[%c0_12, %c0_13] : memref<256x128xbf16, #tpu.memory_space<vmem>>, vector<256x128xbf16>
    %cst_14 = arith.constant dense<0.000000e+00> : vector<8x128xf32>
    %18 = tpu.matmul %16, %17, %cst_14 {dimension_numbers = #tpu.dot_dimension_numbers<[1], [0], [0], [1], [0, 0, 1, 1], [], []>} : vector<8x256xbf16>, vector<256x128xbf16>, vector<8x128xf32> -> vector<8x128xf32>
    %c0_15 = arith.constant 0 : index
    %c0_16 = arith.constant 0 : index
    %19 = vector.load %arg7[%c0_15, %c0_16] : memref<1x128xf32, #tpu.memory_space<vmem>>, vector<1x128xf32>
    %20 = vector.broadcast %19 : vector<1x128xf32> to vector<8x128xf32>
    %21 = arith.addf %18, %20 : vector<8x128xf32>
    %cst_17 = arith.constant 0.000000e+00 : f32
    %22 = vector.broadcast %cst_17 : f32 to vector<8x128xf32>
    %23 = arith.maximumf %21, %22 : vector<8x128xf32>
    %24 = arith.truncf %23 : vector<8x128xf32> to vector<8x128xbf16>
    %c0_18 = arith.constant 0 : index
    %c0_19 = arith.constant 0 : index
    %25 = vector.load %arg8[%c0_18, %c0_19] : memref<128x128xbf16, #tpu.memory_space<vmem>>, vector<128x128xbf16>
    %cst_20 = arith.constant dense<0.000000e+00> : vector<8x128xf32>
    %26 = tpu.matmul %24, %25, %cst_20 {dimension_numbers = #tpu.dot_dimension_numbers<[1], [0], [0], [1], [0, 0, 1, 1], [], []>} : vector<8x128xbf16>, vector<128x128xbf16>, vector<8x128xf32> -> vector<8x128xf32>
    %c0_21 = arith.constant 0 : index
    %c0_22 = arith.constant 0 : index
    %27 = vector.load %arg9[%c0_21, %c0_22] : memref<1x128xf32, #tpu.memory_space<vmem>>, vector<1x128xf32>
    %28 = vector.broadcast %27 : vector<1x128xf32> to vector<8x128xf32>
    %29 = arith.addf %26, %28 : vector<8x128xf32>
    %c0_23 = arith.constant 0 : index
    %c0_24 = arith.constant 0 : index
    %30 = vector.load %arg10[%c0_23, %c0_24] : memref<8x128xf32, #tpu.memory_space<vmem>>, vector<8x128xf32>
    tpu.vector_store %arg10[%c0_23, %c0_24], %29 {strides = array<i32>} : memref<8x128xf32, #tpu.memory_space<vmem>>, vector<8x128xf32>,
    return
  }
  func.func @transform_0(%arg0: i32) -> (i32, i32) {
    %c0_i32 = arith.constant 0 : i32
    %c0_i32_0 = arith.constant 0 : i32
    return %arg0, %c0_i32 : i32, i32
  }
  func.func @transform_1(%arg0: i32) -> (i32, i32) {
    %c0_i32 = arith.constant 0 : i32
    %c0_i32_0 = arith.constant 0 : i32
    %c0_i32_1 = arith.constant 0 : i32
    return %c0_i32, %c0_i32_0 : i32, i32
  }
  func.func @transform_2(%arg0: i32) -> (i32, i32) {
    %c0_i32 = arith.constant 0 : i32
    %c0_i32_0 = arith.constant 0 : i32
    %c0_i32_1 = arith.constant 0 : i32
    return %c0_i32, %c0_i32_0 : i32, i32
  }
  func.func @transform_3(%arg0: i32) -> (i32, i32) {
    %c0_i32 = arith.constant 0 : i32
    %c0_i32_0 = arith.constant 0 : i32
    %c0_i32_1 = arith.constant 0 : i32
    return %c0_i32, %c0_i32_0 : i32, i32
  }
  func.func @transform_4(%arg0: i32) -> (i32, i32) {
    %c0_i32 = arith.constant 0 : i32
    %c0_i32_0 = arith.constant 0 : i32
    %c0_i32_1 = arith.constant 0 : i32
    return %c0_i32, %c0_i32_0 : i32, i32
  }
  func.func @transform_5(%arg0: i32) -> (i32, i32) {
    %c0_i32 = arith.constant 0 : i32
    %c0_i32_0 = arith.constant 0 : i32
    %c0_i32_1 = arith.constant 0 : i32
    return %c0_i32, %c0_i32_0 : i32, i32
  }
  func.func @transform_6(%arg0: i32) -> (i32, i32) {
    %c0_i32 = arith.constant 0 : i32
    %c0_i32_0 = arith.constant 0 : i32
    %c0_i32_1 = arith.constant 0 : i32
    return %c0_i32, %c0_i32_0 : i32, i32
  }
  func.func @transform_7(%arg0: i32) -> (i32, i32) {
    %c0_i32 = arith.constant 0 : i32
    %c0_i32_0 = arith.constant 0 : i32
    %c0_i32_1 = arith.constant 0 : i32
    return %c0_i32, %c0_i32_0 : i32, i32
  }
  func.func @transform_8(%arg0: i32) -> (i32, i32) {
    %c0_i32 = arith.constant 0 : i32
    %c0_i32_0 = arith.constant 0 : i32
    %c0_i32_1 = arith.constant 0 : i32
    return %c0_i32, %c0_i32_0 : i32, i32
  }
  func.func @transform_9(%arg0: i32) -> (i32, i32) {
    %c0_i32 = arith.constant 0 : i32
    %c0_i32_0 = arith.constant 0 : i32
    return %arg0, %c0_i32 : i32, i32
  }
}

</mosaic_0001>

<llo_original>
// kernel: tpu_custom_call.1
$region0: #{tpu_custom_call.1}
  #allocation0 [shape = 'u32[]', space=smem, size = 0x4, offset = 0x4, fixed_abs, tag = 'smem constant byte address 0x4 - core index']
  #allocation1 [shape = 'u32[144,128]{1,0:T(1,128)}', space=vmem, size = 0x12000, scoped, tag = 'internal scratch']
  %s0 = inlined_call_operand.hbm [shape: bf16[8,768], index: 0, kind: input, shape index: {}]
  %s1 = inlined_call_operand.hbm [shape: bf16[768,512], index: 1, kind: input, shape index: {}]
  %s2 = inlined_call_operand.hbm [shape: f32[1,512], index: 2, kind: input, shape index: {}]
  %s3 = inlined_call_operand.hbm [shape: bf16[512,256], index: 3, kind: input, shape index: {}]
  %s4 = inlined_call_operand.vmem [shape: f32[1,256], index: 4, kind: input, shape index: {}]
  %s5 = inlined_call_operand.hbm [shape: bf16[256,128], index: 5, kind: input, shape index: {}]
  %s6 = inlined_call_operand.vmem [shape: f32[1,128], index: 6, kind: input, shape index: {}]
  %s7 = inlined_call_operand.hbm [shape: bf16[128,128], index: 7, kind: input, shape index: {}]
  %s8 = inlined_call_operand.vmem [shape: f32[1,128], index: 8, kind: input, shape index: {}]
  %s9 = inlined_call_operand.hbm [shape: f32[8,128], index: 9, kind: output, shape index: {}]
  %s10 = sld [smem:[#allocation0]]
  $region70: #{tpu_custom_call.1} parent=0
    _
  %s12 = ssub.s32 1, %s10
  %s13 = scalar_select 0, %s12, %s10
  $region1: #{tpu_custom_call.1} parent=0
    #allocation2 [shape = 'u8[12288]{0}', space=vmem, size = 0x3000, scoped, tag = 'input window, operand 0, single buffered']
    #allocation3 [shape = 's32[1]{0}', space=sflag, size = 0x4, scoped, tag = 'scoped memory for tpu_custom_call.1']
    #allocation4 [shape = 's32[1]{0}', space=sflag, size = 0x4, scoped, tag = 'scoped memory for tpu_custom_call.1']
    #allocation5 [shape = 'u8[786432]{0}', space=vmem, size = 0xc0000, scoped, tag = 'input window, operand 1, single buffered']
    #allocation6 [shape = 's32[1]{0}', space=sflag, size = 0x4, scoped, tag = 'scoped memory for tpu_custom_call.1']
    #allocation7 [shape = 'u8[2048]{0}', space=vmem, size = 0x800, scoped, tag = 'input window, operand 2, single buffered']
    #allocation8 [shape = 'u8[262144]{0}', space=vmem, size = 0x40000, scoped, tag = 'input window, operand 3, single buffered']
    #allocation9 [shape = 's32[1]{0}', space=sflag, size = 0x4, scoped, tag = 'scoped memory for tpu_custom_call.1']
    #allocation10 [shape = 'u8[65536]{0}', space=vmem, size = 0x10000, scoped, tag = 'input window, operand 5, single buffered']
    #allocation11 [shape = 'u8[32768]{0}', space=vmem, size = 0x8000, scoped, tag = 'input window, operand 7, single buffered']
    #allocation12 [shape = 's32[1]{0}', space=sflag, size = 0x4, scoped, tag = 'scoped memory for tpu_custom_call.1']
    #allocation13 [shape = 'u8[4096]{0}', space=vmem, size = 0x1000, scoped, tag = 'output window, operand 0, single buffered']
    %14 = vsyncpa [#allocation3], 0
    %15 = vsyncpa [#allocation6], 0
    %16 = vsyncpa [#allocation9], 0
    %17 = vsyncpa [#allocation12], 0
    %18 = vsyncpa [#allocation4], 0
    // Predicated region
    $region2: #{tpu_custom_call.1} parent=1 // pred_check
      _
    $region3: #{tpu_custom_call.1} parent=1 // pred_check_branch
      %20 = sbr.rel (0) target = $region5
    $region4: #{tpu_custom_call.1} parent=1 // pred_region
      %s22 = ssub.s32 384, 384
      %23 = vsyncadd [#allocation3], %s22
      %s25 = sshll.u32 [#allocation2], 4
      %s26 = int_to_ptr.vmem [resolvable:$true] %s25
      %28 = dma.hbm_to_vmem [thread:$0]  %s0, 384, %s26, [#allocation3]
    $region5: #{tpu_custom_call.1} parent=1 // pred_fallthru
      _
    // Predicated region
    $region6: #{tpu_custom_call.1} parent=1 // pred_check
      _
    $region7: #{tpu_custom_call.1} parent=1 // pred_check_branch
      %30 = sbr.rel (0) target = $region9
    $region8: #{tpu_custom_call.1} parent=1 // pred_region
      %s32 = ssub.s32 24576, 24576
      %33 = vsyncadd [#allocation6], %s32
      %s34 = sshll.u32 [#allocation5], 4
      %s35 = int_to_ptr.vmem [resolvable:$true] %s34
      %40 = dma.hbm_to_vmem [thread:$0]  %s1, 24576, %s35, [#allocation6], 256, 256, 16
    $region9: #{tpu_custom_call.1} parent=1 // pred_fallthru
      _
    // Predicated region
    $region10: #{tpu_custom_call.1} parent=1 // pred_check
      _
    $region11: #{tpu_custom_call.1} parent=1 // pred_check_branch
      %42 = sbr.rel (0) target = $region13
    $region12: #{tpu_custom_call.1} parent=1 // pred_region
      %s44 = ssub.s32 64, 64
      %45 = vsyncadd [#allocation6], %s44
      %s47 = sshll.u32 [#allocation7], 4
      %s48 = int_to_ptr.vmem [resolvable:$true] %s47
      %50 = dma.hbm_to_vmem [thread:$0]  %s2, 64, %s48, [#allocation6]
    $region13: #{tpu_custom_call.1} parent=1 // pred_fallthru
      _
    // Predicated region
    $region14: #{tpu_custom_call.1} parent=1 // pred_check
      _
    $region15: #{tpu_custom_call.1} parent=1 // pred_check_branch
      %52 = sbr.rel (0) target = $region17
    $region16: #{tpu_custom_call.1} parent=1 // pred_region
      %s54 = ssub.s32 8192, 8192
      %55 = vsyncadd [#allocation9], %s54
      %s56 = sshll.u32 [#allocation8], 4
      %s57 = int_to_ptr.vmem [resolvable:$true] %s56
      %62 = dma.hbm_to_vmem [thread:$0]  %s3, 8192, %s57, [#allocation9], 128, 128, 8
    $region17: #{tpu_custom_call.1} parent=1 // pred_fallthru
      _
    // Predicated region
    $region18: #{tpu_custom_call.1} parent=1 // pred_check
      _
    $region19: #{tpu_custom_call.1} parent=1 // pred_check_branch
      %64 = sbr.rel (0) target = $region21
    $region20: #{tpu_custom_call.1} parent=1 // pred_region
      _
    $region21: #{tpu_custom_call.1} parent=1 // pred_fallthru
      _
    // Predicated region
    $region22: #{tpu_custom_call.1} parent=1 // pred_check
      _
    $region23: #{tpu_custom_call.1} parent=1 // pred_check_branch
      %66 = sbr.rel (0) target = $region25
    $region24: #{tpu_custom_call.1} parent=1 // pred_region
      %s68 = ssub.s32 2048, 2048
      %69 = vsyncadd [#allocation9], %s68
      %s70 = sshll.u32 [#allocation10], 4
      %s71 = int_to_ptr.vmem [resolvable:$true] %s70
      %76 = dma.hbm_to_vmem [thread:$0]  %s5, 2048, %s71, [#allocation9], 64, 64, 4
    $region25: #{tpu_custom_call.1} parent=1 // pred_fallthru
      _
    // Predicated region
    $region26: #{tpu_custom_call.1} parent=1 // pred_check
      _
    $region27: #{tpu_custom_call.1} parent=1 // pred_check_branch
      %78 = sbr.rel (0) target = $region29
    $region28: #{tpu_custom_call.1} parent=1 // pred_region
      _
    $region29: #{tpu_custom_call.1} parent=1 // pred_fallthru
      _
    // Predicated region
    $region30: #{tpu_custom_call.1} parent=1 // pred_check
      _
    $region31: #{tpu_custom_call.1} parent=1 // pred_check_branch
      %80 = sbr.rel (0) target = $region33
    $region32: #{tpu_custom_call.1} parent=1 // pred_region
      %s82 = ssub.s32 1024, 1024
      %83 = vsyncadd [#allocation12], %s82
      %s84 = sshll.u32 [#allocation11], 4
      %s85 = int_to_ptr.vmem [resolvable:$true] %s84
      %90 = dma.hbm_to_vmem [thread:$0]  %s7, 1024, %s85, [#allocation12], 64, 64, 4
    $region33: #{tpu_custom_call.1} parent=1 // pred_fallthru
      _
    // Predicated region
    $region34: #{tpu_custom_call.1} parent=1 // pred_check
      _
    $region35: #{tpu_custom_call.1} parent=1 // pred_check_branch
      %92 = sbr.rel (0) target = $region37
    $region36: #{tpu_custom_call.1} parent=1 // pred_region
      _
    $region37: #{tpu_custom_call.1} parent=1 // pred_fallthru
      _
    // Predicated region
    $region38: #{tpu_custom_call.1} parent=1 // pred_check
      _
    $region39: #{tpu_custom_call.1} parent=1 // pred_check_branch
      %94 = sbr.rel (0) target = $region41
    $region40: #{tpu_custom_call.1} parent=1 // pred_region
      %95 = dma.done [#allocation3], 384
    $region41: #{tpu_custom_call.1} parent=1 // pred_fallthru
      _
    // Predicated region
    $region42: #{tpu_custom_call.1} parent=1 // pred_check
      _
    $region43: #{tpu_custom_call.1} parent=1 // pred_check_branch
      %97 = sbr.rel (0) target = $region45
    $region44: #{tpu_custom_call.1} parent=1 // pred_region
      %98 = dma.done [#allocation6], 24576
    $region45: #{tpu_custom_call.1} parent=1 // pred_fallthru
      _
    // Predicated region
    $region46: #{tpu_custom_call.1} parent=1 // pred_check
      _
    $region47: #{tpu_custom_call.1} parent=1 // pred_check_branch
      %100 = sbr.rel (0) target = $region49
    $region48: #{tpu_custom_call.1} parent=1 // pred_region
      %101 = dma.done [#allocation6], 64
    $region49: #{tpu_custom_call.1} parent=1 // pred_fallthru
      _
    // Predicated region
    $region50: #{tpu_custom_call.1} parent=1 // pred_check
      _
    $region51: #{tpu_custom_call.1} parent=1 // pred_check_branch
      %103 = sbr.rel (0) target = $region53
    $region52: #{tpu_custom_call.1} parent=1 // pred_region
      %104 = dma.done [#allocation9], 8192
    $region53: #{tpu_custom_call.1} parent=1 // pred_fallthru
      _
    // Predicated region
    $region54: #{tpu_custom_call.1} parent=1 // pred_check
      _
    $region55: #{tpu_custom_call.1} parent=1 // pred_check_branch
      %106 = sbr.rel (0) target = $region57
    $region56: #{tpu_custom_call.1} parent=1 // pred_region
      %107 = dma.done [#allocation9], 2048
    $region57: #{tpu_custom_call.1} parent=1 // pred_fallthru
      _
    // Predicated region
    $region58: #{tpu_custom_call.1} parent=1 // pred_check
      _
    $region59: #{tpu_custom_call.1} parent=1 // pred_check_branch
      %109 = sbr.rel (0) target = $region61
    $region60: #{tpu_custom_call.1} parent=1 // pred_region
      %110 = dma.done [#allocation12], 1024
    $region61: #{tpu_custom_call.1} parent=1 // pred_fallthru
      _
    %v112 = vld [vmem:[#allocation2] sm:$0xff]
    %v113 = vld [vmem:[#allocation2 + $0x8] sm:$0xff]
    %v114 = vld [vmem:[#allocation2 + $0x10] sm:$0xff]
    %v115 = vld [vmem:[#allocation5] sm:$0xff]
    %v116 = vld [vmem:[#allocation5 + $0x8] sm:$0xff]
    %v117 = vld [vmem:[#allocation5 + $0x10] sm:$0xff]
    %v118 = vld [vmem:[#allocation5 + $0x18] sm:$0xff]
    %v119 = vld [vmem:[#allocation5 + $0x20] sm:$0xff]
    %v120 = vld [vmem:[#allocation5 + $0x28] sm:$0xff]
    %v121 = vld [vmem:[#allocation5 + $0x30] sm:$0xff]
    %v122 = vld [vmem:[#allocation5 + $0x38] sm:$0xff]
    %v123 = vld [vmem:[#allocation5 + $0x40] sm:$0xff]
    %v124 = vld [vmem:[#allocation5 + $0x48] sm:$0xff]
    %v125 = vld [vmem:[#allocation5 + $0x50] sm:$0xff]
    %v126 = vld [vmem:[#allocation5 + $0x58] sm:$0xff]
    %v127 = vld [vmem:[#allocation5 + $0x60] sm:$0xff]
    %v128 = vld [vmem:[#allocation5 + $0x68] sm:$0xff]
    %v129 = vld [vmem:[#allocation5 + $0x70] sm:$0xff]
    %v130 = vld [vmem:[#allocation5 + $0x78] sm:$0xff]
    %v131 = vld [vmem:[#allocation5 + $0x80] sm:$0xff]
    %v132 = vld [vmem:[#allocation5 + $0x88] sm:$0xff]
    %v133 = vld [vmem:[#allocation5 + $0x90] sm:$0xff]
    %v134 = vld [vmem:[#allocation5 + $0x98] sm:$0xff]
    %v135 = vld [vmem:[#allocation5 + $0xa0] sm:$0xff]
    %v136 = vld [vmem:[#allocation5 + $0xa8] sm:$0xff]
    %v137 = vld [vmem:[#allocation5 + $0xb0] sm:$0xff]
    %v138 = vld [vmem:[#allocation5 + $0xb8] sm:$0xff]
    %v139 = vld [vmem:[#allocation5 + $0xc0] sm:$0xff]
    %v140 = vld [vmem:[#allocation5 + $0xc8] sm:$0xff]
    %v141 = vld [vmem:[#allocation5 + $0xd0] sm:$0xff]
    %v142 = vld [vmem:[#allocation5 + $0xd8] sm:$0xff]
    %v143 = vld [vmem:[#allocation5 + $0xe0] sm:$0xff]
    %v144 = vld [vmem:[#allocation5 + $0xe8] sm:$0xff]
    %v145 = vld [vmem:[#allocation5 + $0xf0] sm:$0xff]
    %v146 = vld [vmem:[#allocation5 + $0xf8] sm:$0xff]
    %v147 = vld [vmem:[#allocation5 + $0x100] sm:$0xff]
    %v148 = vld [vmem:[#allocation5 + $0x108] sm:$0xff]
    %v149 = vld [vmem:[#allocation5 + $0x110] sm:$0xff]
    %v150 = vld [vmem:[#allocation5 + $0x118] sm:$0xff]
    %v151 = vld [vmem:[#allocation5 + $0x120] sm:$0xff]
    %v152 = vld [vmem:[#allocation5 + $0x128] sm:$0xff]
    %v153 = vld [vmem:[#allocation5 + $0x130] sm:$0xff]
    %v154 = vld [vmem:[#allocation5 + $0x138] sm:$0xff]
    %v155 = vld [vmem:[#allocation5 + $0x140] sm:$0xff]
    %v156 = vld [vmem:[#allocation5 + $0x148] sm:$0xff]
    %v157 = vld [vmem:[#allocation5 + $0x150] sm:$0xff]
    %v158 = vld [vmem:[#allocation5 + $0x158] sm:$0xff]
    %v159 = vld [vmem:[#allocation5 + $0x160] sm:$0xff]
    %v160 = vld [vmem:[#allocation5 + $0x168] sm:$0xff]
    %v161 = vld [vmem:[#allocation5 + $0x170] sm:$0xff]
    %v162 = vld [vmem:[#allocation5 + $0x178] sm:$0xff]
    %v163 = vld [vmem:[#allocation5 + $0x180] sm:$0xff]
    %v164 = vld [vmem:[#allocation5 + $0x188] sm:$0xff]
    %v165 = vld [vmem:[#allocation5 + $0x190] sm:$0xff]
    %v166 = vld [vmem:[#allocation5 + $0x198] sm:$0xff]
    %v167 = vld [vmem:[#allocation5 + $0x1a0] sm:$0xff]
    %v168 = vld [vmem:[#allocation5 + $0x1a8] sm:$0xff]
    %v169 = vld [vmem:[#allocation5 + $0x1b0] sm:$0xff]
    %v170 = vld [vmem:[#allocation5 + $0x1b8] sm:$0xff]
    %v171 = vld [vmem:[#allocation5 + $0x1c0] sm:$0xff]
    %v172 = vld [vmem:[#allocation5 + $0x1c8] sm:$0xff]
    %v173 = vld [vmem:[#allocation5 + $0x1d0] sm:$0xff]
    %v174 = vld [vmem:[#allocation5 + $0x1d8] sm:$0xff]
    %v175 = vld [vmem:[#allocation5 + $0x1e0] sm:$0xff]
    %v176 = vld [vmem:[#allocation5 + $0x1e8] sm:$0xff]
    %v177 = vld [vmem:[#allocation5 + $0x1f0] sm:$0xff]
    %v178 = vld [vmem:[#allocation5 + $0x1f8] sm:$0xff]
    %v179 = vld [vmem:[#allocation5 + $0x200] sm:$0xff]
    %v180 = vld [vmem:[#allocation5 + $0x208] sm:$0xff]
    %v181 = vld [vmem:[#allocation5 + $0x210] sm:$0xff]
    %v182 = vld [vmem:[#allocation5 + $0x218] sm:$0xff]
    %v183 = vld [vmem:[#allocation5 + $0x220] sm:$0xff]
    %v184 = vld [vmem:[#allocation5 + $0x228] sm:$0xff]
    %v185 = vld [vmem:[#allocation5 + $0x230] sm:$0xff]
    %v186 = vld [vmem:[#allocation5 + $0x238] sm:$0xff]
    %v187 = vld [vmem:[#allocation5 + $0x240] sm:$0xff]
    %v188 = vld [vmem:[#allocation5 + $0x248] sm:$0xff]
    %v189 = vld [vmem:[#allocation5 + $0x250] sm:$0xff]
    %v190 = vld [vmem:[#allocation5 + $0x258] sm:$0xff]
    %v191 = vld [vmem:[#allocation5 + $0x260] sm:$0xff]
    %v192 = vld [vmem:[#allocation5 + $0x268] sm:$0xff]
    %v193 = vld [vmem:[#allocation5 + $0x270] sm:$0xff]
    %v194 = vld [vmem:[#allocation5 + $0x278] sm:$0xff]
    %v195 = vld [vmem:[#allocation5 + $0x280] sm:$0xff]
    %v196 = vld [vmem:[#allocation5 + $0x288] sm:$0xff]
    %v197 = vld [vmem:[#allocation5 + $0x290] sm:$0xff]
    %v198 = vld [vmem:[#allocation5 + $0x298] sm:$0xff]
    %v199 = vld [vmem:[#allocation5 + $0x2a0] sm:$0xff]
    %v200 = vld [vmem:[#allocation5 + $0x2a8] sm:$0xff]
    %v201 = vld [vmem:[#allocation5 + $0x2b0] sm:$0xff]
    %v202 = vld [vmem:[#allocation5 + $0x2b8] sm:$0xff]
    %v203 = vld [vmem:[#allocation5 + $0x2c0] sm:$0xff]
    %v204 = vld [vmem:[#allocation5 + $0x2c8] sm:$0xff]
    %v205 = vld [vmem:[#allocation5 + $0x2d0] sm:$0xff]
    %v206 = vld [vmem:[#allocation5 + $0x2d8] sm:$0xff]
    %v207 = vld [vmem:[#allocation5 + $0x2e0] sm:$0xff]
    %v208 = vld [vmem:[#allocation5 + $0x2e8] sm:$0xff]
    %v209 = vld [vmem:[#allocation5 + $0x2f0] sm:$0xff]
    %v210 = vld [vmem:[#allocation5 + $0x2f8] sm:$0xff]
    %v211 = vld [vmem:[#allocation5 + $0x300] sm:$0xff]
    %v212 = vld [vmem:[#allocation5 + $0x308] sm:$0xff]
    %v213 = vld [vmem:[#allocation5 + $0x310] sm:$0xff]
    %v214 = vld [vmem:[#allocation5 + $0x318] sm:$0xff]
    %v215 = vld [vmem:[#allocation5 + $0x320] sm:$0xff]
    %v216 = vld [vmem:[#allocation5 + $0x328] sm:$0xff]
    %v217 = vld [vmem:[#allocation5 + $0x330] sm:$0xff]
    %v218 = vld [vmem:[#allocation5 + $0x338] sm:$0xff]
    %v219 = vld [vmem:[#allocation5 + $0x340] sm:$0xff]
    %v220 = vld [vmem:[#allocation5 + $0x348] sm:$0xff]
    %v221 = vld [vmem:[#allocation5 + $0x350] sm:$0xff]
    %v222 = vld [vmem:[#allocation5 + $0x358] sm:$0xff]
    %v223 = vld [vmem:[#allocation5 + $0x360] sm:$0xff]
    %v224 = vld [vmem:[#allocation5 + $0x368] sm:$0xff]
    %v225 = vld [vmem:[#allocation5 + $0x370] sm:$0xff]
    %v226 = vld [vmem:[#allocation5 + $0x378] sm:$0xff]
    %v227 = vld [vmem:[#allocation5 + $0x380] sm:$0xff]
    %v228 = vld [vmem:[#allocation5 + $0x388] sm:$0xff]
    %v229 = vld [vmem:[#allocation5 + $0x390] sm:$0xff]
    %v230 = vld [vmem:[#allocation5 + $0x398] sm:$0xff]
    %v231 = vld [vmem:[#allocation5 + $0x3a0] sm:$0xff]
    %v232 = vld [vmem:[#allocation5 + $0x3a8] sm:$0xff]
    %v233 = vld [vmem:[#allocation5 + $0x3b0] sm:$0xff]
    %v234 = vld [vmem:[#allocation5 + $0x3b8] sm:$0xff]
    %v235 = vld [vmem:[#allocation5 + $0x3c0] sm:$0xff]
    %v236 = vld [vmem:[#allocation5 + $0x3c8] sm:$0xff]
    %v237 = vld [vmem:[#allocation5 + $0x3d0] sm:$0xff]
    %v238 = vld [vmem:[#allocation5 + $0x3d8] sm:$0xff]
    %v239 = vld [vmem:[#allocation5 + $0x3e0] sm:$0xff]
    %v240 = vld [vmem:[#allocation5 + $0x3e8] sm:$0xff]
    %v241 = vld [vmem:[#allocation5 + $0x3f0] sm:$0xff]
    %v242 = vld [vmem:[#allocation5 + $0x3f8] sm:$0xff]
    %v243 = vld [vmem:[#allocation5 + $0x400] sm:$0xff]
    %v244 = vld [vmem:[#allocation5 + $0x408] sm:$0xff]
    %v245 = vld [vmem:[#allocation5 + $0x410] sm:$0xff]
    %v246 = vld [vmem:[#allocation5 + $0x418] sm:$0xff]
    %v247 = vld [vmem:[#allocation5 + $0x420] sm:$0xff]
    %v248 = vld [vmem:[#allocation5 + $0x428] sm:$0xff]
    %v249 = vld [vmem:[#allocation5 + $0x430] sm:$0xff]
    %v250 = vld [vmem:[#allocation5 + $0x438] sm:$0xff]
    %v251 = vld [vmem:[#allocation5 + $0x440] sm:$0xff]
    %v252 = vld [vmem:[#allocation5 + $0x448] sm:$0xff]
    %v253 = vld [vmem:[#allocation5 + $0x450] sm:$0xff]
    %v254 = vld [vmem:[#allocation5 + $0x458] sm:$0xff]
    %v255 = vld [vmem:[#allocation5 + $0x460] sm:$0xff]
    %v256 = vld [vmem:[#allocation5 + $0x468] sm:$0xff]
    %v257 = vld [vmem:[#allocation5 + $0x470] sm:$0xff]
    %v258 = vld [vmem:[#allocation5 + $0x478] sm:$0xff]
    %v259 = vld [vmem:[#allocation5 + $0x480] sm:$0xff]
    %v260 = vld [vmem:[#allocation5 + $0x488] sm:$0xff]
    %v261 = vld [vmem:[#allocation5 + $0x490] sm:$0xff]
    %v262 = vld [vmem:[#allocation5 + $0x498] sm:$0xff]
    %v263 = vld [vmem:[#allocation5 + $0x4a0] sm:$0xff]
    %v264 = vld [vmem:[#allocation5 + $0x4a8] sm:$0xff]
    %v265 = vld [vmem:[#allocation5 + $0x4b0] sm:$0xff]
    %v266 = vld [vmem:[#allocation5 + $0x4b8] sm:$0xff]
    %v267 = vld [vmem:[#allocation5 + $0x4c0] sm:$0xff]
    %v268 = vld [vmem:[#allocation5 + $0x4c8] sm:$0xff]
    %v269 = vld [vmem:[#allocation5 + $0x4d0] sm:$0xff]
    %v270 = vld [vmem:[#allocation5 + $0x4d8] sm:$0xff]
    %v271 = vld [vmem:[#allocation5 + $0x4e0] sm:$0xff]
    %v272 = vld [vmem:[#allocation5 + $0x4e8] sm:$0xff]
    %v273 = vld [vmem:[#allocation5 + $0x4f0] sm:$0xff]
    %v274 = vld [vmem:[#allocation5 + $0x4f8] sm:$0xff]
    %v275 = vld [vmem:[#allocation5 + $0x500] sm:$0xff]
    %v276 = vld [vmem:[#allocation5 + $0x508] sm:$0xff]
    %v277 = vld [vmem:[#allocation5 + $0x510] sm:$0xff]
    %v278 = vld [vmem:[#allocation5 + $0x518] sm:$0xff]
    %v279 = vld [vmem:[#allocation5 + $0x520] sm:$0xff]
    %v280 = vld [vmem:[#allocation5 + $0x528] sm:$0xff]
    %v281 = vld [vmem:[#allocation5 + $0x530] sm:$0xff]
    %v282 = vld [vmem:[#allocation5 + $0x538] sm:$0xff]
    %v283 = vld [vmem:[#allocation5 + $0x540] sm:$0xff]
    %v284 = vld [vmem:[#allocation5 + $0x548] sm:$0xff]
    %v285 = vld [vmem:[#allocation5 + $0x550] sm:$0xff]
    %v286 = vld [vmem:[#allocation5 + $0x558] sm:$0xff]
    %v287 = vld [vmem:[#allocation5 + $0x560] sm:$0xff]
    %v288 = vld [vmem:[#allocation5 + $0x568] sm:$0xff]
    %v289 = vld [vmem:[#allocation5 + $0x570] sm:$0xff]
    %v290 = vld [vmem:[#allocation5 + $0x578] sm:$0xff]
    %v291 = vld [vmem:[#allocation5 + $0x580] sm:$0xff]
    %v292 = vld [vmem:[#allocation5 + $0x588] sm:$0xff]
    %v293 = vld [vmem:[#allocation5 + $0x590] sm:$0xff]
    %v294 = vld [vmem:[#allocation5 + $0x598] sm:$0xff]
    %v295 = vld [vmem:[#allocation5 + $0x5a0] sm:$0xff]
    %v296 = vld [vmem:[#allocation5 + $0x5a8] sm:$0xff]
    %v297 = vld [vmem:[#allocation5 + $0x5b0] sm:$0xff]
    %v298 = vld [vmem:[#allocation5 + $0x5b8] sm:$0xff]
    %v299 = vld [vmem:[#allocation5 + $0x5c0] sm:$0xff]
    %v300 = vld [vmem:[#allocation5 + $0x5c8] sm:$0xff]
    %v301 = vld [vmem:[#allocation5 + $0x5d0] sm:$0xff]
    %v302 = vld [vmem:[#allocation5 + $0x5d8] sm:$0xff]
    %v303 = vld [vmem:[#allocation5 + $0x5e0] sm:$0xff]
    %v304 = vld [vmem:[#allocation5 + $0x5e8] sm:$0xff]
    %v305 = vld [vmem:[#allocation5 + $0x5f0] sm:$0xff]
    %v306 = vld [vmem:[#allocation5 + $0x5f8] sm:$0xff]
    %v307 = vld [vmem:[#allocation7] sm:$0xf]
    %v309 = vlaneseq
    %v310 = vshrl.u32 %v309, 7
    %v311 = vsub.s32 0, %v310
    %v312 = vrot.slane %v307, %v311
    %v313 = vlaneseq
    %v314 = vshrl.u32 %v313, 7
    %v315 = vsub.s32 1, %v314
    %v316 = vrot.slane %v307, %v315
    %v317 = vlaneseq
    %v318 = vshrl.u32 %v317, 7
    %v319 = vsub.s32 2, %v318
    %v320 = vrot.slane %v307, %v319
    %v321 = vlaneseq
    %v322 = vshrl.u32 %v321, 7
    %v323 = vsub.s32 3, %v322
    %v324 = vrot.slane %v307, %v323
    %v332 = vunpack.c.l.b16 %v112
    %v333 = vunpack.c.h.b16 %v112
    %v334 = vunpack.c.l.b16 %v113
    %v335 = vunpack.c.h.b16 %v113
    %v336 = vunpack.c.l.b16 %v114
    %v337 = vunpack.c.h.b16 %v114
    %v338 = vpack.c.b16 %v332, %v332
    %v339 = vpack.c.b16 %v333, %v333
    %v340 = vpack.c.b16 %v334, %v334
    %v341 = vpack.c.b16 %v335, %v335
    %v342 = vpack.c.b16 %v336, %v336
    %v343 = vpack.c.b16 %v337, %v337
    %v542 = vunpack.c.l.b16 %v115
    %v543 = vunpack.c.h.b16 %v115
    %v544 = vunpack.c.l.b16 %v116
    %v545 = vunpack.c.h.b16 %v116
    %v546 = vunpack.c.l.b16 %v117
    %v547 = vunpack.c.h.b16 %v117
    %v548 = vunpack.c.l.b16 %v118
    %v549 = vunpack.c.h.b16 %v118
    %v550 = vunpack.c.l.b16 %v119
    %v551 = vunpack.c.h.b16 %v119
    %v552 = vunpack.c.l.b16 %v120
    %v553 = vunpack.c.h.b16 %v120
    %v554 = vunpack.c.l.b16 %v121
    %v555 = vunpack.c.h.b16 %v121
    %v556 = vunpack.c.l.b16 %v122
    %v557 = vunpack.c.h.b16 %v122
    %v558 = vunpack.c.l.b16 %v123
    %v559 = vunpack.c.h.b16 %v123
    %v560 = vunpack.c.l.b16 %v124
    %v561 = vunpack.c.h.b16 %v124
    %v562 = vunpack.c.l.b16 %v125
    %v563 = vunpack.c.h.b16 %v125
    %v564 = vunpack.c.l.b16 %v126
    %v565 = vunpack.c.h.b16 %v126
    %v566 = vunpack.c.l.b16 %v127
    %v567 = vunpack.c.h.b16 %v127
    %v568 = vunpack.c.l.b16 %v128
    %v569 = vunpack.c.h.b16 %v128
    %v570 = vunpack.c.l.b16 %v129
    %v571 = vunpack.c.h.b16 %v129
    %v572 = vunpack.c.l.b16 %v130
    %v573 = vunpack.c.h.b16 %v130
    %v574 = vunpack.c.l.b16 %v131
    %v575 = vunpack.c.h.b16 %v131
    %v576 = vunpack.c.l.b16 %v132
    %v577 = vunpack.c.h.b16 %v132
    %v578 = vunpack.c.l.b16 %v133
    %v579 = vunpack.c.h.b16 %v133
    %v580 = vunpack.c.l.b16 %v134
    %v581 = vunpack.c.h.b16 %v134
    %v582 = vunpack.c.l.b16 %v135
    %v583 = vunpack.c.h.b16 %v135
    %v584 = vunpack.c.l.b16 %v136
    %v585 = vunpack.c.h.b16 %v136
    %v586 = vunpack.c.l.b16 %v137
    %v587 = vunpack.c.h.b16 %v137
    %v588 = vunpack.c.l.b16 %v138
    %v589 = vunpack.c.h.b16 %v138
    %v590 = vunpack.c.l.b16 %v139
    %v591 = vunpack.c.h.b16 %v139
    %v592 = vunpack.c.l.b16 %v140
    %v593 = vunpack.c.h.b16 %v140
    %v594 = vunpack.c.l.b16 %v141
    %v595 = vunpack.c.h.b16 %v141
    %v596 = vunpack.c.l.b16 %v142
    %v597 = vunpack.c.h.b16 %v142
    %v598 = vunpack.c.l.b16 %v143
    %v599 = vunpack.c.h.b16 %v143
    %v600 = vunpack.c.l.b16 %v144
    %v601 = vunpack.c.h.b16 %v144
    %v602 = vunpack.c.l.b16 %v145
    %v603 = vunpack.c.h.b16 %v145
    %v604 = vunpack.c.l.b16 %v146
    %v605 = vunpack.c.h.b16 %v146
    %v606 = vunpack.c.l.b16 %v147
    %v607 = vunpack.c.h.b16 %v147
    %v608 = vunpack.c.l.b16 %v148
    %v609 = vunpack.c.h.b16 %v148
    %v610 = vunpack.c.l.b16 %v149
    %v611 = vunpack.c.h.b16 %v149
    %v612 = vunpack.c.l.b16 %v150
    %v613 = vunpack.c.h.b16 %v150
    %v614 = vunpack.c.l.b16 %v151
    %v615 = vunpack.c.h.b16 %v151
    %v616 = vunpack.c.l.b16 %v152
    %v617 = vunpack.c.h.b16 %v152
    %v618 = vunpack.c.l.b16 %v153
    %v619 = vunpack.c.h.b16 %v153
    %v620 = vunpack.c.l.b16 %v154
    %v621 = vunpack.c.h.b16 %v154
    %v622 = vunpack.c.l.b16 %v155
    %v623 = vunpack.c.h.b16 %v155
    %v624 = vunpack.c.l.b16 %v156
    %v625 = vunpack.c.h.b16 %v156
    %v626 = vunpack.c.l.b16 %v157
    %v627 = vunpack.c.h.b16 %v157
    %v628 = vunpack.c.l.b16 %v158
    %v629 = vunpack.c.h.b16 %v158
    %v630 = vunpack.c.l.b16 %v159
    %v631 = vunpack.c.h.b16 %v159
    %v632 = vunpack.c.l.b16 %v160
    %v633 = vunpack.c.h.b16 %v160
    %v634 = vunpack.c.l.b16 %v161
    %v635 = vunpack.c.h.b16 %v161
    %v636 = vunpack.c.l.b16 %v162
    %v637 = vunpack.c.h.b16 %v162
    %v638 = vunpack.c.l.b16 %v163
    %v639 = vunpack.c.h.b16 %v163
    %v640 = vunpack.c.l.b16 %v164
    %v641 = vunpack.c.h.b16 %v164
    %v642 = vunpack.c.l.b16 %v165
    %v643 = vunpack.c.h.b16 %v165
    %v644 = vunpack.c.l.b16 %v166
    %v645 = vunpack.c.h.b16 %v166
    %v646 = vunpack.c.l.b16 %v167
    %v647 = vunpack.c.h.b16 %v167
    %v648 = vunpack.c.l.b16 %v168
    %v649 = vunpack.c.h.b16 %v168
    %v650 = vunpack.c.l.b16 %v169
    %v651 = vunpack.c.h.b16 %v169
    %v652 = vunpack.c.l.b16 %v170
    %v653 = vunpack.c.h.b16 %v170
    %v654 = vunpack.c.l.b16 %v171
    %v655 = vunpack.c.h.b16 %v171
    %v656 = vunpack.c.l.b16 %v172
    %v657 = vunpack.c.h.b16 %v172
    %v658 = vunpack.c.l.b16 %v173
    %v659 = vunpack.c.h.b16 %v173
    %v660 = vunpack.c.l.b16 %v174
    %v661 = vunpack.c.h.b16 %v174
    %v662 = vunpack.c.l.b16 %v175
    %v663 = vunpack.c.h.b16 %v175
    %v664 = vunpack.c.l.b16 %v176
    %v665 = vunpack.c.h.b16 %v176
    %v666 = vunpack.c.l.b16 %v177
    %v667 = vunpack.c.h.b16 %v177
    %v668 = vunpack.c.l.b16 %v178
    %v669 = vunpack.c.h.b16 %v178
    %v670 = vunpack.c.l.b16 %v179
    %v671 = vunpack.c.h.b16 %v179
    %v672 = vunpack.c.l.b16 %v180
    %v673 = vunpack.c.h.b16 %v180
    %v674 = vunpack.c.l.b16 %v181
    %v675 = vunpack.c.h.b16 %v181
    %v676 = vunpack.c.l.b16 %v182
    %v677 = vunpack.c.h.b16 %v182
    %v678 = vunpack.c.l.b16 %v183
    %v679 = vunpack.c.h.b16 %v183
    %v680 = vunpack.c.l.b16 %v184
    %v681 = vunpack.c.h.b16 %v184
    %v682 = vunpack.c.l.b16 %v185
    %v683 = vunpack.c.h.b16 %v185
    %v684 = vunpack.c.l.b16 %v186
    %v685 = vunpack.c.h.b16 %v186
    %v686 = vunpack.c.l.b16 %v187
    %v687 = vunpack.c.h.b16 %v187
    %v688 = vunpack.c.l.b16 %v188
    %v689 = vunpack.c.h.b16 %v188
    %v690 = vunpack.c.l.b16 %v189
    %v691 = vunpack.c.h.b16 %v189
    %v692 = vunpack.c.l.b16 %v190
    %v693 = vunpack.c.h.b16 %v190
    %v694 = vunpack.c.l.b16 %v191
    %v695 = vunpack.c.h.b16 %v191
    %v696 = vunpack.c.l.b16 %v192
    %v697 = vunpack.c.h.b16 %v192
    %v698 = vunpack.c.l.b16 %v193
    %v699 = vunpack.c.h.b16 %v193
    %v700 = vunpack.c.l.b16 %v194
    %v701 = vunpack.c.h.b16 %v194
    %v702 = vunpack.c.l.b16 %v195
    %v703 = vunpack.c.h.b16 %v195
    %v704 = vunpack.c.l.b16 %v196
    %v705 = vunpack.c.h.b16 %v196
    %v706 = vunpack.c.l.b16 %v197
    %v707 = vunpack.c.h.b16 %v197
    %v708 = vunpack.c.l.b16 %v198
    %v709 = vunpack.c.h.b16 %v198
    %v710 = vunpack.c.l.b16 %v199
    %v711 = vunpack.c.h.b16 %v199
    %v712 = vunpack.c.l.b16 %v200
    %v713 = vunpack.c.h.b16 %v200
    %v714 = vunpack.c.l.b16 %v201
    %v715 = vunpack.c.h.b16 %v201
    %v716 = vunpack.c.l.b16 %v202
    %v717 = vunpack.c.h.b16 %v202
    %v718 = vunpack.c.l.b16 %v203
    %v719 = vunpack.c.h.b16 %v203
    %v720 = vunpack.c.l.b16 %v204
    %v721 = vunpack.c.h.b16 %v204
    %v722 = vunpack.c.l.b16 %v205
    %v723 = vunpack.c.h.b16 %v205
    %v724 = vunpack.c.l.b16 %v206
    %v725 = vunpack.c.h.b16 %v206
    %v726 = vunpack.c.l.b16 %v207
    %v727 = vunpack.c.h.b16 %v207
    %v728 = vunpack.c.l.b16 %v208
    %v729 = vunpack.c.h.b16 %v208
    %v730 = vunpack.c.l.b16 %v209
    %v731 = vunpack.c.h.b16 %v209
    %v732 = vunpack.c.l.b16 %v210
    %v733 = vunpack.c.h.b16 %v210
    %v734 = vunpack.c.l.b16 %v211
    %v735 = vunpack.c.h.b16 %v211
    %v736 = vunpack.c.l.b16 %v212
    %v737 = vunpack.c.h.b16 %v212
    %v738 = vunpack.c.l.b16 %v213
    %v739 = vunpack.c.h.b16 %v213
    %v740 = vunpack.c.l.b16 %v214
    %v741 = vunpack.c.h.b16 %v214
    %v742 = vunpack.c.l.b16 %v215
    %v743 = vunpack.c.h.b16 %v215
    %v744 = vunpack.c.l.b16 %v216
    %v745 = vunpack.c.h.b16 %v216
    %v746 = vunpack.c.l.b16 %v217
    %v747 = vunpack.c.h.b16 %v217
    %v748 = vunpack.c.l.b16 %v218
    %v749 = vunpack.c.h.b16 %v218
    %v750 = vunpack.c.l.b16 %v219
    %v751 = vunpack.c.h.b16 %v219
    %v752 = vunpack.c.l.b16 %v220
    %v753 = vunpack.c.h.b16 %v220
    %v754 = vunpack.c.l.b16 %v221
    %v755 = vunpack.c.h.b16 %v221
    %v756 = vunpack.c.l.b16 %v222
    %v757 = vunpack.c.h.b16 %v222
    %v758 = vunpack.c.l.b16 %v223
    %v759 = vunpack.c.h.b16 %v223
    %v760 = vunpack.c.l.b16 %v224
    %v761 = vunpack.c.h.b16 %v224
    %v762 = vunpack.c.l.b16 %v225
    %v763 = vunpack.c.h.b16 %v225
    %v764 = vunpack.c.l.b16 %v226
    %v765 = vunpack.c.h.b16 %v226
    %v766 = vunpack.c.l.b16 %v227
    %v767 = vunpack.c.h.b16 %v227
    %v768 = vunpack.c.l.b16 %v228
    %v769 = vunpack.c.h.b16 %v228
    %v770 = vunpack.c.l.b16 %v229
    %v771 = vunpack.c.h.b16 %v229
    %v772 = vunpack.c.l.b16 %v230
    %v773 = vunpack.c.h.b16 %v230
    %v774 = vunpack.c.l.b16 %v231
    %v775 = vunpack.c.h.b16 %v231
    %v776 = vunpack.c.l.b16 %v232
    %v777 = vunpack.c.h.b16 %v232
    %v778 = vunpack.c.l.b16 %v233
    %v779 = vunpack.c.h.b16 %v233
    %v780 = vunpack.c.l.b16 %v234
    %v781 = vunpack.c.h.b16 %v234
    %v782 = vunpack.c.l.b16 %v235
    %v783 = vunpack.c.h.b16 %v235
    %v784 = vunpack.c.l.b16 %v236
    %v785 = vunpack.c.h.b16 %v236
    %v786 = vunpack.c.l.b16 %v237
    %v787 = vunpack.c.h.b16 %v237
    %v788 = vunpack.c.l.b16 %v238
    %v789 = vunpack.c.h.b16 %v238
    %v790 = vunpack.c.l.b16 %v239
    %v791 = vunpack.c.h.b16 %v239
    %v792 = vunpack.c.l.b16 %v240
    %v793 = vunpack.c.h.b16 %v240
    %v794 = vunpack.c.l.b16 %v241
    %v795 = vunpack.c.h.b16 %v241
    %v796 = vunpack.c.l.b16 %v242
    %v797 = vunpack.c.h.b16 %v242
    %v798 = vunpack.c.l.b16 %v243
    %v799 = vunpack.c.h.b16 %v243
    %v800 = vunpack.c.l.b16 %v244
    %v801 = vunpack.c.h.b16 %v244
    %v802 = vunpack.c.l.b16 %v245
    %v803 = vunpack.c.h.b16 %v245
    %v804 = vunpack.c.l.b16 %v246
    %v805 = vunpack.c.h.b16 %v246
    %v806 = vunpack.c.l.b16 %v247
    %v807 = vunpack.c.h.b16 %v247
    %v808 = vunpack.c.l.b16 %v248
    %v809 = vunpack.c.h.b16 %v248
    %v810 = vunpack.c.l.b16 %v249
    %v811 = vunpack.c.h.b16 %v249
    %v812 = vunpack.c.l.b16 %v250
    %v813 = vunpack.c.h.b16 %v250
    %v814 = vunpack.c.l.b16 %v251
    %v815 = vunpack.c.h.b16 %v251
    %v816 = vunpack.c.l.b16 %v252
    %v817 = vunpack.c.h.b16 %v252
    %v818 = vunpack.c.l.b16 %v253
    %v819 = vunpack.c.h.b16 %v253
    %v820 = vunpack.c.l.b16 %v254
    %v821 = vunpack.c.h.b16 %v254
    %v822 = vunpack.c.l.b16 %v255
    %v823 = vunpack.c.h.b16 %v255
    %v824 = vunpack.c.l.b16 %v256
    %v825 = vunpack.c.h.b16 %v256
    %v826 = vunpack.c.l.b16 %v257
    %v827 = vunpack.c.h.b16 %v257
    %v828 = vunpack.c.l.b16 %v258
    %v829 = vunpack.c.h.b16 %v258
    %v830 = vunpack.c.l.b16 %v259
    %v831 = vunpack.c.h.b16 %v259
    %v832 = vunpack.c.l.b16 %v260
    %v833 = vunpack.c.h.b16 %v260
    %v834 = vunpack.c.l.b16 %v261
    %v835 = vunpack.c.h.b16 %v261
    %v836 = vunpack.c.l.b16 %v262
    %v837 = vunpack.c.h.b16 %v262
    %v838 = vunpack.c.l.b16 %v263
    %v839 = vunpack.c.h.b16 %v263
    %v840 = vunpack.c.l.b16 %v264
    %v841 = vunpack.c.h.b16 %v264
    %v842 = vunpack.c.l.b16 %v265
    %v843 = vunpack.c.h.b16 %v265
    %v844 = vunpack.c.l.b16 %v266
    %v845 = vunpack.c.h.b16 %v266
    %v846 = vunpack.c.l.b16 %v267
    %v847 = vunpack.c.h.b16 %v267
    %v848 = vunpack.c.l.b16 %v268
    %v849 = vunpack.c.h.b16 %v268
    %v850 = vunpack.c.l.b16 %v269
    %v851 = vunpack.c.h.b16 %v269
    %v852 = vunpack.c.l.b16 %v270
    %v853 = vunpack.c.h.b16 %v270
    %v854 = vunpack.c.l.b16 %v271
    %v855 = vunpack.c.h.b16 %v271
    %v856 = vunpack.c.l.b16 %v272
    %v857 = vunpack.c.h.b16 %v272
    %v858 = vunpack.c.l.b16 %v273
    %v859 = vunpack.c.h.b16 %v273
    %v860 = vunpack.c.l.b16 %v274
    %v861 = vunpack.c.h.b16 %v274
    %v862 = vunpack.c.l.b16 %v275
    %v863 = vunpack.c.h.b16 %v275
    %v864 = vunpack.c.l.b16 %v276
    %v865 = vunpack.c.h.b16 %v276
    %v866 = vunpack.c.l.b16 %v277
    %v867 = vunpack.c.h.b16 %v277
    %v868 = vunpack.c.l.b16 %v278
    %v869 = vunpack.c.h.b16 %v278
    %v870 = vunpack.c.l.b16 %v279
    %v871 = vunpack.c.h.b16 %v279
    %v872 = vunpack.c.l.b16 %v280
    %v873 = vunpack.c.h.b16 %v280
    %v874 = vunpack.c.l.b16 %v281
    %v875 = vunpack.c.h.b16 %v281
    %v876 = vunpack.c.l.b16 %v282
    %v877 = vunpack.c.h.b16 %v282
    %v878 = vunpack.c.l.b16 %v283
    %v879 = vunpack.c.h.b16 %v283
    %v880 = vunpack.c.l.b16 %v284
    %v881 = vunpack.c.h.b16 %v284
    %v882 = vunpack.c.l.b16 %v285
    %v883 = vunpack.c.h.b16 %v285
    %v884 = vunpack.c.l.b16 %v286
    %v885 = vunpack.c.h.b16 %v286
    %v886 = vunpack.c.l.b16 %v287
    %v887 = vunpack.c.h.b16 %v287
    %v888 = vunpack.c.l.b16 %v288
    %v889 = vunpack.c.h.b16 %v288
    %v890 = vunpack.c.l.b16 %v289
    %v891 = vunpack.c.h.b16 %v289
    %v892 = vunpack.c.l.b16 %v290
    %v893 = vunpack.c.h.b16 %v290
    %v894 = vunpack.c.l.b16 %v291
    %v895 = vunpack.c.h.b16 %v291
    %v896 = vunpack.c.l.b16 %v292
    %v897 = vunpack.c.h.b16 %v292
    %v898 = vunpack.c.l.b16 %v293
    %v899 = vunpack.c.h.b16 %v293
    %v900 = vunpack.c.l.b16 %v294
    %v901 = vunpack.c.h.b16 %v294
    %v902 = vunpack.c.l.b16 %v295
    %v903 = vunpack.c.h.b16 %v295
    %v904 = vunpack.c.l.b16 %v296
    %v905 = vunpack.c.h.b16 %v296
    %v906 = vunpack.c.l.b16 %v297
    %v907 = vunpack.c.h.b16 %v297
    %v908 = vunpack.c.l.b16 %v298
    %v909 = vunpack.c.h.b16 %v298
    %v910 = vunpack.c.l.b16 %v299
    %v911 = vunpack.c.h.b16 %v299
    %v912 = vunpack.c.l.b16 %v300
    %v913 = vunpack.c.h.b16 %v300
    %v914 = vunpack.c.l.b16 %v301
    %v915 = vunpack.c.h.b16 %v301
    %v916 = vunpack.c.l.b16 %v302
    %v917 = vunpack.c.h.b16 %v302
    %v918 = vunpack.c.l.b16 %v303
    %v919 = vunpack.c.h.b16 %v303
    %v920 = vunpack.c.l.b16 %v304
    %v921 = vunpack.c.h.b16 %v304
    %v922 = vunpack.c.l.b16 %v305
    %v923 = vunpack.c.h.b16 %v305
    %v924 = vunpack.c.l.b16 %v306
    %v925 = vunpack.c.h.b16 %v306
    %v926 = vpack.c.b16 %v546, %v542
    %v927 = vpack.c.b16 %v547, %v543
    %v928 = vpack.c.b16 %v548, %v544
    %v929 = vpack.c.b16 %v549, %v545
    %v930 = vpack.c.b16 %v554, %v550
    %v931 = vpack.c.b16 %v555, %v551
    %v932 = vpack.c.b16 %v556, %v552
    %v933 = vpack.c.b16 %v557, %v553
    %v934 = vpack.c.b16 %v562, %v558
    %v935 = vpack.c.b16 %v563, %v559
    %v936 = vpack.c.b16 %v564, %v560
    %v937 = vpack.c.b16 %v565, %v561
    %v938 = vpack.c.b16 %v570, %v566
    %v939 = vpack.c.b16 %v571, %v567
    %v940 = vpack.c.b16 %v572, %v568
    %v941 = vpack.c.b16 %v573, %v569
    %v942 = vpack.c.b16 %v578, %v574
    %v943 = vpack.c.b16 %v579, %v575
    %v944 = vpack.c.b16 %v580, %v576
    %v945 = vpack.c.b16 %v581, %v577
    %v946 = vpack.c.b16 %v586, %v582
    %v947 = vpack.c.b16 %v587, %v583
    %v948 = vpack.c.b16 %v588, %v584
    %v949 = vpack.c.b16 %v589, %v585
    %v950 = vpack.c.b16 %v594, %v590
    %v951 = vpack.c.b16 %v595, %v591
    %v952 = vpack.c.b16 %v596, %v592
    %v953 = vpack.c.b16 %v597, %v593
    %v954 = vpack.c.b16 %v602, %v598
    %v955 = vpack.c.b16 %v603, %v599
    %v956 = vpack.c.b16 %v604, %v600
    %v957 = vpack.c.b16 %v605, %v601
    %v958 = vpack.c.b16 %v610, %v606
    %v959 = vpack.c.b16 %v611, %v607
    %v960 = vpack.c.b16 %v612, %v608
    %v961 = vpack.c.b16 %v613, %v609
    %v962 = vpack.c.b16 %v618, %v614
    %v963 = vpack.c.b16 %v619, %v615
    %v964 = vpack.c.b16 %v620, %v616
    %v965 = vpack.c.b16 %v621, %v617
    %v966 = vpack.c.b16 %v626, %v622
    %v967 = vpack.c.b16 %v627, %v623
    %v968 = vpack.c.b16 %v628, %v624
    %v969 = vpack.c.b16 %v629, %v625
    %v970 = vpack.c.b16 %v634, %v630
    %v971 = vpack.c.b16 %v635, %v631
    %v972 = vpack.c.b16 %v636, %v632
    %v973 = vpack.c.b16 %v637, %v633
    %v974 = vpack.c.b16 %v642, %v638
    %v975 = vpack.c.b16 %v643, %v639
    %v976 = vpack.c.b16 %v644, %v640
    %v977 = vpack.c.b16 %v645, %v641
    %v978 = vpack.c.b16 %v650, %v646
    %v979 = vpack.c.b16 %v651, %v647
    %v980 = vpack.c.b16 %v652, %v648
    %v981 = vpack.c.b16 %v653, %v649
    %v982 = vpack.c.b16 %v658, %v654
    %v983 = vpack.c.b16 %v659, %v655
    %v984 = vpack.c.b16 %v660, %v656
    %v985 = vpack.c.b16 %v661, %v657
    %v986 = vpack.c.b16 %v666, %v662
    %v987 = vpack.c.b16 %v667, %v663
    %v988 = vpack.c.b16 %v668, %v664
    %v989 = vpack.c.b16 %v669, %v665
    %v990 = vpack.c.b16 %v674, %v670
    %v991 = vpack.c.b16 %v675, %v671
    %v992 = vpack.c.b16 %v676, %v672
    %v993 = vpack.c.b16 %v677, %v673
    %v994 = vpack.c.b16 %v682, %v678
    %v995 = vpack.c.b16 %v683, %v679
    %v996 = vpack.c.b16 %v684, %v680
    %v997 = vpack.c.b16 %v685, %v681
    %v998 = vpack.c.b16 %v690, %v686
    %v999 = vpack.c.b16 %v691, %v687
    %v1000 = vpack.c.b16 %v692, %v688
    %v1001 = vpack.c.b16 %v693, %v689
    %v1002 = vpack.c.b16 %v698, %v694
    %v1003 = vpack.c.b16 %v699, %v695
    %v1004 = vpack.c.b16 %v700, %v696
    %v1005 = vpack.c.b16 %v701, %v697
    %v1006 = vpack.c.b16 %v706, %v702
    %v1007 = vpack.c.b16 %v707, %v703
    %v1008 = vpack.c.b16 %v708, %v704
    %v1009 = vpack.c.b16 %v709, %v705
    %v1010 = vpack.c.b16 %v714, %v710
    %v1011 = vpack.c.b16 %v715, %v711
    %v1012 = vpack.c.b16 %v716, %v712
    %v1013 = vpack.c.b16 %v717, %v713
    %v1014 = vpack.c.b16 %v722, %v718
    %v1015 = vpack.c.b16 %v723, %v719
    %v1016 = vpack.c.b16 %v724, %v720
    %v1017 = vpack.c.b16 %v725, %v721
    %v1018 = vpack.c.b16 %v730, %v726
    %v1019 = vpack.c.b16 %v731, %v727
    %v1020 = vpack.c.b16 %v732, %v728
    %v1021 = vpack.c.b16 %v733, %v729
    %v1022 = vpack.c.b16 %v738, %v734
    %v1023 = vpack.c.b16 %v739, %v735
    %v1024 = vpack.c.b16 %v740, %v736
    %v1025 = vpack.c.b16 %v741, %v737
    %v1026 = vpack.c.b16 %v746, %v742
    %v1027 = vpack.c.b16 %v747, %v743
    %v1028 = vpack.c.b16 %v748, %v744
    %v1029 = vpack.c.b16 %v749, %v745
    %v1030 = vpack.c.b16 %v754, %v750
    %v1031 = vpack.c.b16 %v755, %v751
    %v1032 = vpack.c.b16 %v756, %v752
    %v1033 = vpack.c.b16 %v757, %v753
    %v1034 = vpack.c.b16 %v762, %v758
    %v1035 = vpack.c.b16 %v763, %v759
    %v1036 = vpack.c.b16 %v764, %v760
    %v1037 = vpack.c.b16 %v765, %v761
    %v1038 = vpack.c.b16 %v770, %v766
    %v1039 = vpack.c.b16 %v771, %v767
    %v1040 = vpack.c.b16 %v772, %v768
    %v1041 = vpack.c.b16 %v773, %v769
    %v1042 = vpack.c.b16 %v778, %v774
    %v1043 = vpack.c.b16 %v779, %v775
    %v1044 = vpack.c.b16 %v780, %v776
    %v1045 = vpack.c.b16 %v781, %v777
    %v1046 = vpack.c.b16 %v786, %v782
    %v1047 = vpack.c.b16 %v787, %v783
    %v1048 = vpack.c.b16 %v788, %v784
    %v1049 = vpack.c.b16 %v789, %v785
    %v1050 = vpack.c.b16 %v794, %v790
    %v1051 = vpack.c.b16 %v795, %v791
    %v1052 = vpack.c.b16 %v796, %v792
    %v1053 = vpack.c.b16 %v797, %v793
    %v1054 = vpack.c.b16 %v802, %v798
    %v1055 = vpack.c.b16 %v803, %v799
    %v1056 = vpack.c.b16 %v804, %v800
    %v1057 = vpack.c.b16 %v805, %v801
    %v1058 = vpack.c.b16 %v810, %v806
    %v1059 = vpack.c.b16 %v811, %v807
    %v1060 = vpack.c.b16 %v812, %v808
    %v1061 = vpack.c.b16 %v813, %v809
    %v1062 = vpack.c.b16 %v818, %v814
    %v1063 = vpack.c.b16 %v819, %v815
    %v1064 = vpack.c.b16 %v820, %v816
    %v1065 = vpack.c.b16 %v821, %v817
    %v1066 = vpack.c.b16 %v826, %v822
    %v1067 = vpack.c.b16 %v827, %v823
    %v1068 = vpack.c.b16 %v828, %v824
    %v1069 = vpack.c.b16 %v829, %v825
    %v1070 = vpack.c.b16 %v834, %v830
    %v1071 = vpack.c.b16 %v835, %v831
    %v1072 = vpack.c.b16 %v836, %v832
    %v1073 = vpack.c.b16 %v837, %v833
    %v1074 = vpack.c.b16 %v842, %v838
    %v1075 = vpack.c.b16 %v843, %v839
    %v1076 = vpack.c.b16 %v844, %v840
    %v1077 = vpack.c.b16 %v845, %v841
    %v1078 = vpack.c.b16 %v850, %v846
    %v1079 = vpack.c.b16 %v851, %v847
    %v1080 = vpack.c.b16 %v852, %v848
    %v1081 = vpack.c.b16 %v853, %v849
    %v1082 = vpack.c.b16 %v858, %v854
    %v1083 = vpack.c.b16 %v859, %v855
    %v1084 = vpack.c.b16 %v860, %v856
    %v1085 = vpack.c.b16 %v861, %v857
    %v1086 = vpack.c.b16 %v866, %v862
    %v1087 = vpack.c.b16 %v867, %v863
    %v1088 = vpack.c.b16 %v868, %v864
    %v1089 = vpack.c.b16 %v869, %v865
    %v1090 = vpack.c.b16 %v874, %v870
    %v1091 = vpack.c.b16 %v875, %v871
    %v1092 = vpack.c.b16 %v876, %v872
    %v1093 = vpack.c.b16 %v877, %v873
    %v1094 = vpack.c.b16 %v882, %v878
    %v1095 = vpack.c.b16 %v883, %v879
    %v1096 = vpack.c.b16 %v884, %v880
    %v1097 = vpack.c.b16 %v885, %v881
    %v1098 = vpack.c.b16 %v890, %v886
    %v1099 = vpack.c.b16 %v891, %v887
    %v1100 = vpack.c.b16 %v892, %v888
    %v1101 = vpack.c.b16 %v893, %v889
    %v1102 = vpack.c.b16 %v898, %v894
    %v1103 = vpack.c.b16 %v899, %v895
    %v1104 = vpack.c.b16 %v900, %v896
    %v1105 = vpack.c.b16 %v901, %v897
    %v1106 = vpack.c.b16 %v906, %v902
    %v1107 = vpack.c.b16 %v907, %v903
    %v1108 = vpack.c.b16 %v908, %v904
    %v1109 = vpack.c.b16 %v909, %v905
    %v1110 = vpack.c.b16 %v914, %v910
    %v1111 = vpack.c.b16 %v915, %v911
    %v1112 = vpack.c.b16 %v916, %v912
    %v1113 = vpack.c.b16 %v917, %v913
    %v1114 = vpack.c.b16 %v922, %v918
    %v1115 = vpack.c.b16 %v923, %v919
    %v1116 = vpack.c.b16 %v924, %v920
    %v1117 = vpack.c.b16 %v925, %v921
    %1310 = vmatprep.subr.bf16.mxu0 %v955
    %1311 = vmatpush1.bf16.msra.mxu0 %v954
    %1312 = vmatprep.subr.bf16.mxu0 %v951
    %1313 = vmatpush1.bf16.msra.mxu0 %v950
    %1314 = vmatprep.subr.bf16.mxu0 %v947
    %1315 = vmatpush1.bf16.msra.mxu0 %v946
    %1316 = vmatprep.subr.bf16.mxu0 %v943
    %1317 = vmatpush1.bf16.msra.mxu0 %v942
    %1318 = vmatprep.subr.bf16.mxu0 %v939
    %1319 = vmatpush1.bf16.msra.mxu0 %v938
    %1320 = vmatprep.subr.bf16.mxu0 %v935
    %1321 = vmatpush1.bf16.msra.mxu0 %v934
    %1322 = vmatprep.subr.bf16.mxu0 %v931
    %1323 = vmatpush1.bf16.msra.mxu0 %v930
    %1324 = vmatprep.subr.bf16.mxu0 %v927
    %1325 = vmatpush1.bf16.msra.mxu0 %v926
    %1326 = vmatprep.subr.bf16.mxu0 %v987
    %1327 = vmatpush2.bf16.msra.mxu0 %v986
    %1328 = vmatprep.subr.bf16.mxu0 %v983
    %1329 = vmatpush2.bf16.msra.mxu0 %v982
    %1330 = vmatprep.subr.bf16.mxu0 %v979
    %1331 = vmatpush2.bf16.msra.mxu0 %v978
    %1332 = vmatprep.subr.bf16.mxu0 %v975
    %1333 = vmatpush2.bf16.msra.mxu0 %v974
    %1334 = vmatprep.subr.bf16.mxu0 %v971
    %1335 = vmatpush2.bf16.msra.mxu0 %v970
    %1336 = vmatprep.subr.bf16.mxu0 %v967
    %1337 = vmatpush2.bf16.msra.mxu0 %v966
    %1338 = vmatprep.subr.bf16.mxu0 %v963
    %1339 = vmatpush2.bf16.msra.mxu0 %v962
    %1340 = vmatprep.subr.bf16.mxu0 %v959
    %1341 = vmatpush2.bf16.msra.mxu0 %v958
    %1342 = vmatprep.mubr.bf16.mxu0 %v339
    %1343 = vmatmul.mubr.bf16.gmra.mxu0 %v338
    %v1344 = vpop.f32.mrf.mxu0
    %v1345 = vadd.f32 %v312, %v1344
    %v1346 = vpop.f32.mrf.mxu0
    %v1347 = vadd.f32 %v316, %v1346
    %v1348 = vpop.f32.mrf.mxu0
    %v1349 = vpop.f32.mrf.mxu0
    %1350 = vdwg.mxu0
    %1351 = vmatprep.subr.bf16.mxu0 %v1019
    %1352 = vmatpush1.bf16.msra.mxu0 %v1018
    %1353 = vmatprep.subr.bf16.mxu0 %v1015
    %1354 = vmatpush1.bf16.msra.mxu0 %v1014
    %1355 = vmatprep.subr.bf16.mxu0 %v1011
    %1356 = vmatpush1.bf16.msra.mxu0 %v1010
    %1357 = vmatprep.subr.bf16.mxu0 %v1007
    %1358 = vmatpush1.bf16.msra.mxu0 %v1006
    %1359 = vmatprep.subr.bf16.mxu0 %v1003
    %1360 = vmatpush1.bf16.msra.mxu0 %v1002
    %1361 = vmatprep.subr.bf16.mxu0 %v999
    %1362 = vmatpush1.bf16.msra.mxu0 %v998
    %1363 = vmatprep.subr.bf16.mxu0 %v995
    %1364 = vmatpush1.bf16.msra.mxu0 %v994
    %1365 = vmatprep.subr.bf16.mxu0 %v991
    %1366 = vmatpush1.bf16.msra.mxu0 %v990
    %1367 = vmatprep.subr.bf16.mxu0 %v1051
    %1368 = vmatpush2.bf16.msra.mxu0 %v1050
    %1369 = vmatprep.subr.bf16.mxu0 %v1047
    %1370 = vmatpush2.bf16.msra.mxu0 %v1046
    %1371 = vmatprep.subr.bf16.mxu0 %v1043
    %1372 = vmatpush2.bf16.msra.mxu0 %v1042
    %1373 = vmatprep.subr.bf16.mxu0 %v1039
    %1374 = vmatpush2.bf16.msra.mxu0 %v1038
    %1375 = vmatprep.subr.bf16.mxu0 %v1035
    %1376 = vmatpush2.bf16.msra.mxu0 %v1034
    %1377 = vmatprep.subr.bf16.mxu0 %v1031
    %1378 = vmatpush2.bf16.msra.mxu0 %v1030
    %1379 = vmatprep.subr.bf16.mxu0 %v1027
    %1380 = vmatpush2.bf16.msra.mxu0 %v1026
    %1381 = vmatprep.subr.bf16.mxu0 %v1023
    %1382 = vmatpush2.bf16.msra.mxu0 %v1022
    %1383 = vmatprep.mubr.bf16.mxu0 %v341
    %1384 = vmatmul.mubr.bf16.gmra.mxu0 %v340
    %v1385 = vpop.f32.mrf.mxu0
    %v1386 = vadd.f32 %v1345, %v1385
    %v1387 = vpop.f32.mrf.mxu0
    %v1388 = vadd.f32 %v1347, %v1387
    %v1389 = vpop.f32.mrf.mxu0
    %v1390 = vpop.f32.mrf.mxu0
    %1391 = vdwg.mxu0
    %1392 = vmatprep.subr.bf16.mxu0 %v1083
    %1393 = vmatpush1.bf16.msra.mxu0 %v1082
    %1394 = vmatprep.subr.bf16.mxu0 %v1079
    %1395 = vmatpush1.bf16.msra.mxu0 %v1078
    %1396 = vmatprep.subr.bf16.mxu0 %v1075
    %1397 = vmatpush1.bf16.msra.mxu0 %v1074
    %1398 = vmatprep.subr.bf16.mxu0 %v1071
    %1399 = vmatpush1.bf16.msra.mxu0 %v1070
    %1400 = vmatprep.subr.bf16.mxu0 %v1067
    %1401 = vmatpush1.bf16.msra.mxu0 %v1066
    %1402 = vmatprep.subr.bf16.mxu0 %v1063
    %1403 = vmatpush1.bf16.msra.mxu0 %v1062
    %1404 = vmatprep.subr.bf16.mxu0 %v1059
    %1405 = vmatpush1.bf16.msra.mxu0 %v1058
    %1406 = vmatprep.subr.bf16.mxu0 %v1055
    %1407 = vmatpush1.bf16.msra.mxu0 %v1054
    %1408 = vmatprep.subr.bf16.mxu0 %v1115
    %1409 = vmatpush2.bf16.msra.mxu0 %v1114
    %1410 = vmatprep.subr.bf16.mxu0 %v1111
    %1411 = vmatpush2.bf16.msra.mxu0 %v1110
    %1412 = vmatprep.subr.bf16.mxu0 %v1107
    %1413 = vmatpush2.bf16.msra.mxu0 %v1106
    %1414 = vmatprep.subr.bf16.mxu0 %v1103
    %1415 = vmatpush2.bf16.msra.mxu0 %v1102
    %1416 = vmatprep.subr.bf16.mxu0 %v1099
    %1417 = vmatpush2.bf16.msra.mxu0 %v1098
    %1418 = vmatprep.subr.bf16.mxu0 %v1095
    %1419 = vmatpush2.bf16.msra.mxu0 %v1094
    %1420 = vmatprep.subr.bf16.mxu0 %v1091
    %1421 = vmatpush2.bf16.msra.mxu0 %v1090
    %1422 = vmatprep.subr.bf16.mxu0 %v1087
    %1423 = vmatpush2.bf16.msra.mxu0 %v1086
    %1424 = vmatprep.mubr.bf16.mxu0 %v343
    %1425 = vmatmul.mubr.bf16.gmra.mxu0 %v342
    %v1426 = vpop.f32.mrf.mxu0
    %v1427 = vadd.f32 %v1386, %v1426
    %v1428 = vpop.f32.mrf.mxu0
    %v1429 = vadd.f32 %v1388, %v1428
    %v1430 = vpop.f32.mrf.mxu0
    %v1431 = vpop.f32.mrf.mxu0
    %1432 = vdwg.mxu0
    %1433 = vmatprep.subr.bf16.mxu0 %v957
    %1434 = vmatpush1.bf16.msra.mxu0 %v956
    %1435 = vmatprep.subr.bf16.mxu0 %v953
    %1436 = vmatpush1.bf16.msra.mxu0 %v952
    %1437 = vmatprep.subr.bf16.mxu0 %v949
    %1438 = vmatpush1.bf16.msra.mxu0 %v948
    %1439 = vmatprep.subr.bf16.mxu0 %v945
    %1440 = vmatpush1.bf16.msra.mxu0 %v944
    %1441 = vmatprep.subr.bf16.mxu0 %v941
    %1442 = vmatpush1.bf16.msra.mxu0 %v940
    %1443 = vmatprep.subr.bf16.mxu0 %v937
    %1444 = vmatpush1.bf16.msra.mxu0 %v936
    %1445 = vmatprep.subr.bf16.mxu0 %v933
    %1446 = vmatpush1.bf16.msra.mxu0 %v932
    %1447 = vmatprep.subr.bf16.mxu0 %v929
    %1448 = vmatpush1.bf16.msra.mxu0 %v928
    %1449 = vmatprep.subr.bf16.mxu0 %v989
    %1450 = vmatpush2.bf16.msra.mxu0 %v988
    %1451 = vmatprep.subr.bf16.mxu0 %v985
    %1452 = vmatpush2.bf16.msra.mxu0 %v984
    %1453 = vmatprep.subr.bf16.mxu0 %v981
    %1454 = vmatpush2.bf16.msra.mxu0 %v980
    %1455 = vmatprep.subr.bf16.mxu0 %v977
    %1456 = vmatpush2.bf16.msra.mxu0 %v976
    %1457 = vmatprep.subr.bf16.mxu0 %v973
    %1458 = vmatpush2.bf16.msra.mxu0 %v972
    %1459 = vmatprep.subr.bf16.mxu0 %v969
    %1460 = vmatpush2.bf16.msra.mxu0 %v968
    %1461 = vmatprep.subr.bf16.mxu0 %v965
    %1462 = vmatpush2.bf16.msra.mxu0 %v964
    %1463 = vmatprep.subr.bf16.mxu0 %v961
    %1464 = vmatpush2.bf16.msra.mxu0 %v960
    %1465 = vmatprep.mubr.bf16.mxu0 %v339
    %1466 = vmatmul.mubr.bf16.gmra.mxu0 %v338
    %v1467 = vpop.f32.mrf.mxu0
    %v1468 = vadd.f32 %v320, %v1467
    %v1469 = vpop.f32.mrf.mxu0
    %v1470 = vadd.f32 %v324, %v1469
    %v1471 = vpop.f32.mrf.mxu0
    %v1472 = vpop.f32.mrf.mxu0
    %1473 = vdwg.mxu0
    %1474 = vmatprep.subr.bf16.mxu0 %v1021
    %1475 = vmatpush1.bf16.msra.mxu0 %v1020
    %1476 = vmatprep.subr.bf16.mxu0 %v1017
    %1477 = vmatpush1.bf16.msra.mxu0 %v1016
    %1478 = vmatprep.subr.bf16.mxu0 %v1013
    %1479 = vmatpush1.bf16.msra.mxu0 %v1012
    %1480 = vmatprep.subr.bf16.mxu0 %v1009
    %1481 = vmatpush1.bf16.msra.mxu0 %v1008
    %1482 = vmatprep.subr.bf16.mxu0 %v1005
    %1483 = vmatpush1.bf16.msra.mxu0 %v1004
    %1484 = vmatprep.subr.bf16.mxu0 %v1001
    %1485 = vmatpush1.bf16.msra.mxu0 %v1000
    %1486 = vmatprep.subr.bf16.mxu0 %v997
    %1487 = vmatpush1.bf16.msra.mxu0 %v996
    %1488 = vmatprep.subr.bf16.mxu0 %v993
    %1489 = vmatpush1.bf16.msra.mxu0 %v992
    %1490 = vmatprep.subr.bf16.mxu0 %v1053
    %1491 = vmatpush2.bf16.msra.mxu0 %v1052
    %1492 = vmatprep.subr.bf16.mxu0 %v1049
    %1493 = vmatpush2.bf16.msra.mxu0 %v1048
    %1494 = vmatprep.subr.bf16.mxu0 %v1045
    %1495 = vmatpush2.bf16.msra.mxu0 %v1044
    %1496 = vmatprep.subr.bf16.mxu0 %v1041
    %1497 = vmatpush2.bf16.msra.mxu0 %v1040
    %1498 = vmatprep.subr.bf16.mxu0 %v1037
    %1499 = vmatpush2.bf16.msra.mxu0 %v1036
    %1500 = vmatprep.subr.bf16.mxu0 %v1033
    %1501 = vmatpush2.bf16.msra.mxu0 %v1032
    %1502 = vmatprep.subr.bf16.mxu0 %v1029
    %1503 = vmatpush2.bf16.msra.mxu0 %v1028
    %1504 = vmatprep.subr.bf16.mxu0 %v1025
    %1505 = vmatpush2.bf16.msra.mxu0 %v1024
    %1506 = vmatprep.mubr.bf16.mxu0 %v341
    %1507 = vmatmul.mubr.bf16.gmra.mxu0 %v340
    %v1508 = vpop.f32.mrf.mxu0
    %v1509 = vadd.f32 %v1468, %v1508
    %v1510 = vpop.f32.mrf.mxu0
    %v1511 = vadd.f32 %v1470, %v1510
    %v1512 = vpop.f32.mrf.mxu0
    %v1513 = vpop.f32.mrf.mxu0
    %1514 = vdwg.mxu0
    %1515 = vmatprep.subr.bf16.mxu0 %v1085
    %1516 = vmatpush1.bf16.msra.mxu0 %v1084
    %1517 = vmatprep.subr.bf16.mxu0 %v1081
    %1518 = vmatpush1.bf16.msra.mxu0 %v1080
    %1519 = vmatprep.subr.bf16.mxu0 %v1077
    %1520 = vmatpush1.bf16.msra.mxu0 %v1076
    %1521 = vmatprep.subr.bf16.mxu0 %v1073
    %1522 = vmatpush1.bf16.msra.mxu0 %v1072
    %1523 = vmatprep.subr.bf16.mxu0 %v1069
    %1524 = vmatpush1.bf16.msra.mxu0 %v1068
    %1525 = vmatprep.subr.bf16.mxu0 %v1065
    %1526 = vmatpush1.bf16.msra.mxu0 %v1064
    %1527 = vmatprep.subr.bf16.mxu0 %v1061
    %1528 = vmatpush1.bf16.msra.mxu0 %v1060
    %1529 = vmatprep.subr.bf16.mxu0 %v1057
    %1530 = vmatpush1.bf16.msra.mxu0 %v1056
    %1531 = vmatprep.subr.bf16.mxu0 %v1117
    %1532 = vmatpush2.bf16.msra.mxu0 %v1116
    %1533 = vmatprep.subr.bf16.mxu0 %v1113
    %1534 = vmatpush2.bf16.msra.mxu0 %v1112
    %1535 = vmatprep.subr.bf16.mxu0 %v1109
    %1536 = vmatpush2.bf16.msra.mxu0 %v1108
    %1537 = vmatprep.subr.bf16.mxu0 %v1105
    %1538 = vmatpush2.bf16.msra.mxu0 %v1104
    %1539 = vmatprep.subr.bf16.mxu0 %v1101
    %1540 = vmatpush2.bf16.msra.mxu0 %v1100
    %1541 = vmatprep.subr.bf16.mxu0 %v1097
    %1542 = vmatpush2.bf16.msra.mxu0 %v1096
    %1543 = vmatprep.subr.bf16.mxu0 %v1093
    %1544 = vmatpush2.bf16.msra.mxu0 %v1092
    %1545 = vmatprep.subr.bf16.mxu0 %v1089
    %1546 = vmatpush2.bf16.msra.mxu0 %v1088
    %1547 = vmatprep.mubr.bf16.mxu0 %v343
    %1548 = vmatmul.mubr.bf16.gmra.mxu0 %v342
    %v1549 = vpop.f32.mrf.mxu0
    %v1550 = vadd.f32 %v1509, %v1549
    %v1551 = vpop.f32.mrf.mxu0
    %v1552 = vadd.f32 %v1511, %v1551
    %v1553 = vpop.f32.mrf.mxu0
    %v1554 = vpop.f32.mrf.mxu0
    %1555 = vdwg.mxu0
    %v1556 = vmax.f32 %v1427, 0.0
    %v1557 = vmax.f32 %v1429, 0.0
    %v1558 = vmax.f32 %v1550, 0.0
    %v1559 = vmax.f32 %v1552, 0.0
    %v1560 = vpack.c.bf16 %v1556, %v1556
    %v1561 = vpack.c.bf16 %v1557, %v1557
    %v1562 = vpack.c.bf16 %v1558, %v1558
    %v1563 = vpack.c.bf16 %v1559, %v1559
    %v1564 = vld [vmem:[#allocation8] sm:$0xff]
    %v1565 = vld [vmem:[#allocation8 + $0x8] sm:$0xff]
    %v1566 = vld [vmem:[#allocation8 + $0x10] sm:$0xff]
    %v1567 = vld [vmem:[#allocation8 + $0x18] sm:$0xff]
    %v1568 = vld [vmem:[#allocation8 + $0x20] sm:$0xff]
    %v1569 = vld [vmem:[#allocation8 + $0x28] sm:$0xff]
    %v1570 = vld [vmem:[#allocation8 + $0x30] sm:$0xff]
    %v1571 = vld [vmem:[#allocation8 + $0x38] sm:$0xff]
    %v1572 = vld [vmem:[#allocation8 + $0x40] sm:$0xff]
    %v1573 = vld [vmem:[#allocation8 + $0x48] sm:$0xff]
    %v1574 = vld [vmem:[#allocation8 + $0x50] sm:$0xff]
    %v1575 = vld [vmem:[#allocation8 + $0x58] sm:$0xff]
    %v1576 = vld [vmem:[#allocation8 + $0x60] sm:$0xff]
    %v1577 = vld [vmem:[#allocation8 + $0x68] sm:$0xff]
    %v1578 = vld [vmem:[#allocation8 + $0x70] sm:$0xff]
    %v1579 = vld [vmem:[#allocation8 + $0x78] sm:$0xff]
    %v1580 = vld [vmem:[#allocation8 + $0x80] sm:$0xff]
    %v1581 = vld [vmem:[#allocation8 + $0x88] sm:$0xff]
    %v1582 = vld [vmem:[#allocation8 + $0x90] sm:$0xff]
    %v1583 = vld [vmem:[#allocation8 + $0x98] sm:$0xff]
    %v1584 = vld [vmem:[#allocation8 + $0xa0] sm:$0xff]
    %v1585 = vld [vmem:[#allocation8 + $0xa8] sm:$0xff]
    %v1586 = vld [vmem:[#allocation8 + $0xb0] sm:$0xff]
    %v1587 = vld [vmem:[#allocation8 + $0xb8] sm:$0xff]
    %v1588 = vld [vmem:[#allocation8 + $0xc0] sm:$0xff]
    %v1589 = vld [vmem:[#allocation8 + $0xc8] sm:$0xff]
    %v1590 = vld [vmem:[#allocation8 + $0xd0] sm:$0xff]
    %v1591 = vld [vmem:[#allocation8 + $0xd8] sm:$0xff]
    %v1592 = vld [vmem:[#allocation8 + $0xe0] sm:$0xff]
    %v1593 = vld [vmem:[#allocation8 + $0xe8] sm:$0xff]
    %v1594 = vld [vmem:[#allocation8 + $0xf0] sm:$0xff]
    %v1595 = vld [vmem:[#allocation8 + $0xf8] sm:$0xff]
    %v1596 = vld [vmem:[#allocation8 + $0x100] sm:$0xff]
    %v1597 = vld [vmem:[#allocation8 + $0x108] sm:$0xff]
    %v1598 = vld [vmem:[#allocation8 + $0x110] sm:$0xff]
    %v1599 = vld [vmem:[#allocation8 + $0x118] sm:$0xff]
    %v1600 = vld [vmem:[#allocation8 + $0x120] sm:$0xff]
    %v1601 = vld [vmem:[#allocation8 + $0x128] sm:$0xff]
    %v1602 = vld [vmem:[#allocation8 + $0x130] sm:$0xff]
    %v1603 = vld [vmem:[#allocation8 + $0x138] sm:$0xff]
    %v1604 = vld [vmem:[#allocation8 + $0x140] sm:$0xff]
    %v1605 = vld [vmem:[#allocation8 + $0x148] sm:$0xff]
    %v1606 = vld [vmem:[#allocation8 + $0x150] sm:$0xff]
    %v1607 = vld [vmem:[#allocation8 + $0x158] sm:$0xff]
    %v1608 = vld [vmem:[#allocation8 + $0x160] sm:$0xff]
    %v1609 = vld [vmem:[#allocation8 + $0x168] sm:$0xff]
    %v1610 = vld [vmem:[#allocation8 + $0x170] sm:$0xff]
    %v1611 = vld [vmem:[#allocation8 + $0x178] sm:$0xff]
    %v1612 = vld [vmem:[#allocation8 + $0x180] sm:$0xff]
    %v1613 = vld [vmem:[#allocation8 + $0x188] sm:$0xff]
    %v1614 = vld [vmem:[#allocation8 + $0x190] sm:$0xff]
    %v1615 = vld [vmem:[#allocation8 + $0x198] sm:$0xff]
    %v1616 = vld [vmem:[#allocation8 + $0x1a0] sm:$0xff]
    %v1617 = vld [vmem:[#allocation8 + $0x1a8] sm:$0xff]
    %v1618 = vld [vmem:[#allocation8 + $0x1b0] sm:$0xff]
    %v1619 = vld [vmem:[#allocation8 + $0x1b8] sm:$0xff]
    %v1620 = vld [vmem:[#allocation8 + $0x1c0] sm:$0xff]
    %v1621 = vld [vmem:[#allocation8 + $0x1c8] sm:$0xff]
    %v1622 = vld [vmem:[#allocation8 + $0x1d0] sm:$0xff]
    %v1623 = vld [vmem:[#allocation8 + $0x1d8] sm:$0xff]
    %v1624 = vld [vmem:[#allocation8 + $0x1e0] sm:$0xff]
    %v1625 = vld [vmem:[#allocation8 + $0x1e8] sm:$0xff]
    %v1626 = vld [vmem:[#allocation8 + $0x1f0] sm:$0xff]
    %v1627 = vld [vmem:[#allocation8 + $0x1f8] sm:$0xff]
    %v1628 = vld [vmem:[%s4] sm:$0x3]
    %v1630 = vlaneseq
    %v1631 = vshrl.u32 %v1630, 7
    %v1632 = vsub.s32 0, %v1631
    %v1633 = vrot.slane %v1628, %v1632
    %v1634 = vlaneseq
    %v1635 = vshrl.u32 %v1634, 7
    %v1636 = vsub.s32 1, %v1635
    %v1637 = vrot.slane %v1628, %v1636
    %v1704 = vunpack.c.l.b16 %v1564
    %v1705 = vunpack.c.h.b16 %v1564
    %v1706 = vunpack.c.l.b16 %v1565
    %v1707 = vunpack.c.h.b16 %v1565
    %v1708 = vunpack.c.l.b16 %v1566
    %v1709 = vunpack.c.h.b16 %v1566
    %v1710 = vunpack.c.l.b16 %v1567
    %v1711 = vunpack.c.h.b16 %v1567
    %v1712 = vunpack.c.l.b16 %v1568
    %v1713 = vunpack.c.h.b16 %v1568
    %v1714 = vunpack.c.l.b16 %v1569
    %v1715 = vunpack.c.h.b16 %v1569
    %v1716 = vunpack.c.l.b16 %v1570
    %v1717 = vunpack.c.h.b16 %v1570
    %v1718 = vunpack.c.l.b16 %v1571
    %v1719 = vunpack.c.h.b16 %v1571
    %v1720 = vunpack.c.l.b16 %v1572
    %v1721 = vunpack.c.h.b16 %v1572
    %v1722 = vunpack.c.l.b16 %v1573
    %v1723 = vunpack.c.h.b16 %v1573
    %v1724 = vunpack.c.l.b16 %v1574
    %v1725 = vunpack.c.h.b16 %v1574
    %v1726 = vunpack.c.l.b16 %v1575
    %v1727 = vunpack.c.h.b16 %v1575
    %v1728 = vunpack.c.l.b16 %v1576
    %v1729 = vunpack.c.h.b16 %v1576
    %v1730 = vunpack.c.l.b16 %v1577
    %v1731 = vunpack.c.h.b16 %v1577
    %v1732 = vunpack.c.l.b16 %v1578
    %v1733 = vunpack.c.h.b16 %v1578
    %v1734 = vunpack.c.l.b16 %v1579
    %v1735 = vunpack.c.h.b16 %v1579
    %v1736 = vunpack.c.l.b16 %v1580
    %v1737 = vunpack.c.h.b16 %v1580
    %v1738 = vunpack.c.l.b16 %v1581
    %v1739 = vunpack.c.h.b16 %v1581
    %v1740 = vunpack.c.l.b16 %v1582
    %v1741 = vunpack.c.h.b16 %v1582
    %v1742 = vunpack.c.l.b16 %v1583
    %v1743 = vunpack.c.h.b16 %v1583
    %v1744 = vunpack.c.l.b16 %v1584
    %v1745 = vunpack.c.h.b16 %v1584
    %v1746 = vunpack.c.l.b16 %v1585
    %v1747 = vunpack.c.h.b16 %v1585
    %v1748 = vunpack.c.l.b16 %v1586
    %v1749 = vunpack.c.h.b16 %v1586
    %v1750 = vunpack.c.l.b16 %v1587
    %v1751 = vunpack.c.h.b16 %v1587
    %v1752 = vunpack.c.l.b16 %v1588
    %v1753 = vunpack.c.h.b16 %v1588
    %v1754 = vunpack.c.l.b16 %v1589
    %v1755 = vunpack.c.h.b16 %v1589
    %v1756 = vunpack.c.l.b16 %v1590
    %v1757 = vunpack.c.h.b16 %v1590
    %v1758 = vunpack.c.l.b16 %v1591
    %v1759 = vunpack.c.h.b16 %v1591
    %v1760 = vunpack.c.l.b16 %v1592
    %v1761 = vunpack.c.h.b16 %v1592
    %v1762 = vunpack.c.l.b16 %v1593
    %v1763 = vunpack.c.h.b16 %v1593
    %v1764 = vunpack.c.l.b16 %v1594
    %v1765 = vunpack.c.h.b16 %v1594
    %v1766 = vunpack.c.l.b16 %v1595
    %v1767 = vunpack.c.h.b16 %v1595
    %v1768 = vunpack.c.l.b16 %v1596
    %v1769 = vunpack.c.h.b16 %v1596
    %v1770 = vunpack.c.l.b16 %v1597
    %v1771 = vunpack.c.h.b16 %v1597
    %v1772 = vunpack.c.l.b16 %v1598
    %v1773 = vunpack.c.h.b16 %v1598
    %v1774 = vunpack.c.l.b16 %v1599
    %v1775 = vunpack.c.h.b16 %v1599
    %v1776 = vunpack.c.l.b16 %v1600
    %v1777 = vunpack.c.h.b16 %v1600
    %v1778 = vunpack.c.l.b16 %v1601
    %v1779 = vunpack.c.h.b16 %v1601
    %v1780 = vunpack.c.l.b16 %v1602
    %v1781 = vunpack.c.h.b16 %v1602
    %v1782 = vunpack.c.l.b16 %v1603
    %v1783 = vunpack.c.h.b16 %v1603
    %v1784 = vunpack.c.l.b16 %v1604
    %v1785 = vunpack.c.h.b16 %v1604
    %v1786 = vunpack.c.l.b16 %v1605
    %v1787 = vunpack.c.h.b16 %v1605
    %v1788 = vunpack.c.l.b16 %v1606
    %v1789 = vunpack.c.h.b16 %v1606
    %v1790 = vunpack.c.l.b16 %v1607
    %v1791 = vunpack.c.h.b16 %v1607
    %v1792 = vunpack.c.l.b16 %v1608
    %v1793 = vunpack.c.h.b16 %v1608
    %v1794 = vunpack.c.l.b16 %v1609
    %v1795 = vunpack.c.h.b16 %v1609
    %v1796 = vunpack.c.l.b16 %v1610
    %v1797 = vunpack.c.h.b16 %v1610
    %v1798 = vunpack.c.l.b16 %v1611
    %v1799 = vunpack.c.h.b16 %v1611
    %v1800 = vunpack.c.l.b16 %v1612
    %v1801 = vunpack.c.h.b16 %v1612
    %v1802 = vunpack.c.l.b16 %v1613
    %v1803 = vunpack.c.h.b16 %v1613
    %v1804 = vunpack.c.l.b16 %v1614
    %v1805 = vunpack.c.h.b16 %v1614
    %v1806 = vunpack.c.l.b16 %v1615
    %v1807 = vunpack.c.h.b16 %v1615
    %v1808 = vunpack.c.l.b16 %v1616
    %v1809 = vunpack.c.h.b16 %v1616
    %v1810 = vunpack.c.l.b16 %v1617
    %v1811 = vunpack.c.h.b16 %v1617
    %v1812 = vunpack.c.l.b16 %v1618
    %v1813 = vunpack.c.h.b16 %v1618
    %v1814 = vunpack.c.l.b16 %v1619
    %v1815 = vunpack.c.h.b16 %v1619
    %v1816 = vunpack.c.l.b16 %v1620
    %v1817 = vunpack.c.h.b16 %v1620
    %v1818 = vunpack.c.l.b16 %v1621
    %v1819 = vunpack.c.h.b16 %v1621
    %v1820 = vunpack.c.l.b16 %v1622
    %v1821 = vunpack.c.h.b16 %v1622
    %v1822 = vunpack.c.l.b16 %v1623
    %v1823 = vunpack.c.h.b16 %v1623
    %v1824 = vunpack.c.l.b16 %v1624
    %v1825 = vunpack.c.h.b16 %v1624
    %v1826 = vunpack.c.l.b16 %v1625
    %v1827 = vunpack.c.h.b16 %v1625
    %v1828 = vunpack.c.l.b16 %v1626
    %v1829 = vunpack.c.h.b16 %v1626
    %v1830 = vunpack.c.l.b16 %v1627
    %v1831 = vunpack.c.h.b16 %v1627
    %v1832 = vpack.c.b16 %v1706, %v1704
    %v1833 = vpack.c.b16 %v1707, %v1705
    %v1834 = vpack.c.b16 %v1710, %v1708
    %v1835 = vpack.c.b16 %v1711, %v1709
    %v1836 = vpack.c.b16 %v1714, %v1712
    %v1837 = vpack.c.b16 %v1715, %v1713
    %v1838 = vpack.c.b16 %v1718, %v1716
    %v1839 = vpack.c.b16 %v1719, %v1717
    %v1840 = vpack.c.b16 %v1722, %v1720
    %v1841 = vpack.c.b16 %v1723, %v1721
    %v1842 = vpack.c.b16 %v1726, %v1724
    %v1843 = vpack.c.b16 %v1727, %v1725
    %v1844 = vpack.c.b16 %v1730, %v1728
    %v1845 = vpack.c.b16 %v1731, %v1729
    %v1846 = vpack.c.b16 %v1734, %v1732
    %v1847 = vpack.c.b16 %v1735, %v1733
    %v1848 = vpack.c.b16 %v1738, %v1736
    %v1849 = vpack.c.b16 %v1739, %v1737
    %v1850 = vpack.c.b16 %v1742, %v1740
    %v1851 = vpack.c.b16 %v1743, %v1741
    %v1852 = vpack.c.b16 %v1746, %v1744
    %v1853 = vpack.c.b16 %v1747, %v1745
    %v1854 = vpack.c.b16 %v1750, %v1748
    %v1855 = vpack.c.b16 %v1751, %v1749
    %v1856 = vpack.c.b16 %v1754, %v1752
    %v1857 = vpack.c.b16 %v1755, %v1753
    %v1858 = vpack.c.b16 %v1758, %v1756
    %v1859 = vpack.c.b16 %v1759, %v1757
    %v1860 = vpack.c.b16 %v1762, %v1760
    %v1861 = vpack.c.b16 %v1763, %v1761
    %v1862 = vpack.c.b16 %v1766, %v1764
    %v1863 = vpack.c.b16 %v1767, %v1765
    %v1864 = vpack.c.b16 %v1770, %v1768
    %v1865 = vpack.c.b16 %v1771, %v1769
    %v1866 = vpack.c.b16 %v1774, %v1772
    %v1867 = vpack.c.b16 %v1775, %v1773
    %v1868 = vpack.c.b16 %v1778, %v1776
    %v1869 = vpack.c.b16 %v1779, %v1777
    %v1870 = vpack.c.b16 %v1782, %v1780
    %v1871 = vpack.c.b16 %v1783, %v1781
    %v1872 = vpack.c.b16 %v1786, %v1784
    %v1873 = vpack.c.b16 %v1787, %v1785
    %v1874 = vpack.c.b16 %v1790, %v1788
    %v1875 = vpack.c.b16 %v1791, %v1789
    %v1876 = vpack.c.b16 %v1794, %v1792
    %v1877 = vpack.c.b16 %v1795, %v1793
    %v1878 = vpack.c.b16 %v1798, %v1796
    %v1879 = vpack.c.b16 %v1799, %v1797
    %v1880 = vpack.c.b16 %v1802, %v1800
    %v1881 = vpack.c.b16 %v1803, %v1801
    %v1882 = vpack.c.b16 %v1806, %v1804
    %v1883 = vpack.c.b16 %v1807, %v1805
    %v1884 = vpack.c.b16 %v1810, %v1808
    %v1885 = vpack.c.b16 %v1811, %v1809
    %v1886 = vpack.c.b16 %v1814, %v1812
    %v1887 = vpack.c.b16 %v1815, %v1813
    %v1888 = vpack.c.b16 %v1818, %v1816
    %v1889 = vpack.c.b16 %v1819, %v1817
    %v1890 = vpack.c.b16 %v1822, %v1820
    %v1891 = vpack.c.b16 %v1823, %v1821
    %v1892 = vpack.c.b16 %v1826, %v1824
    %v1893 = vpack.c.b16 %v1827, %v1825
    %v1894 = vpack.c.b16 %v1830, %v1828
    %v1895 = vpack.c.b16 %v1831, %v1829
    %1960 = vmatprep.subr.bf16.mxu0 %v1847
    %1961 = vmatpush1.bf16.msra.mxu0 %v1846
    %1962 = vmatprep.subr.bf16.mxu0 %v1845
    %1963 = vmatpush1.bf16.msra.mxu0 %v1844
    %1964 = vmatprep.subr.bf16.mxu0 %v1843
    %1965 = vmatpush1.bf16.msra.mxu0 %v1842
    %1966 = vmatprep.subr.bf16.mxu0 %v1841
    %1967 = vmatpush1.bf16.msra.mxu0 %v1840
    %1968 = vmatprep.subr.bf16.mxu0 %v1839
    %1969 = vmatpush1.bf16.msra.mxu0 %v1838
    %1970 = vmatprep.subr.bf16.mxu0 %v1837
    %1971 = vmatpush1.bf16.msra.mxu0 %v1836
    %1972 = vmatprep.subr.bf16.mxu0 %v1835
    %1973 = vmatpush1.bf16.msra.mxu0 %v1834
    %1974 = vmatprep.subr.bf16.mxu0 %v1833
    %1975 = vmatpush1.bf16.msra.mxu0 %v1832
    %1976 = vmatprep.subr.bf16.mxu0 %v1863
    %1977 = vmatpush2.bf16.msra.mxu0 %v1862
    %1978 = vmatprep.subr.bf16.mxu0 %v1861
    %1979 = vmatpush2.bf16.msra.mxu0 %v1860
    %1980 = vmatprep.subr.bf16.mxu0 %v1859
    %1981 = vmatpush2.bf16.msra.mxu0 %v1858
    %1982 = vmatprep.subr.bf16.mxu0 %v1857
    %1983 = vmatpush2.bf16.msra.mxu0 %v1856
    %1984 = vmatprep.subr.bf16.mxu0 %v1855
    %1985 = vmatpush2.bf16.msra.mxu0 %v1854
    %1986 = vmatprep.subr.bf16.mxu0 %v1853
    %1987 = vmatpush2.bf16.msra.mxu0 %v1852
    %1988 = vmatprep.subr.bf16.mxu0 %v1851
    %1989 = vmatpush2.bf16.msra.mxu0 %v1850
    %1990 = vmatprep.subr.bf16.mxu0 %v1849
    %1991 = vmatpush2.bf16.msra.mxu0 %v1848
    %1992 = vmatprep.mubr.bf16.mxu0 %v1561
    %1993 = vmatmul.mubr.bf16.gmra.mxu0 %v1560
    %v1994 = vpop.f32.mrf.mxu0
    %v1995 = vadd.f32 %v1633, %v1994
    %v1996 = vpop.f32.mrf.mxu0
    %v1997 = vadd.f32 %v1637, %v1996
    %v1998 = vpop.f32.mrf.mxu0
    %v1999 = vpop.f32.mrf.mxu0
    %2000 = vdwg.mxu0
    %2001 = vmatprep.subr.bf16.mxu0 %v1879
    %2002 = vmatpush1.bf16.msra.mxu0 %v1878
    %2003 = vmatprep.subr.bf16.mxu0 %v1877
    %2004 = vmatpush1.bf16.msra.mxu0 %v1876
    %2005 = vmatprep.subr.bf16.mxu0 %v1875
    %2006 = vmatpush1.bf16.msra.mxu0 %v1874
    %2007 = vmatprep.subr.bf16.mxu0 %v1873
    %2008 = vmatpush1.bf16.msra.mxu0 %v1872
    %2009 = vmatprep.subr.bf16.mxu0 %v1871
    %2010 = vmatpush1.bf16.msra.mxu0 %v1870
    %2011 = vmatprep.subr.bf16.mxu0 %v1869
    %2012 = vmatpush1.bf16.msra.mxu0 %v1868
    %2013 = vmatprep.subr.bf16.mxu0 %v1867
    %2014 = vmatpush1.bf16.msra.mxu0 %v1866
    %2015 = vmatprep.subr.bf16.mxu0 %v1865
    %2016 = vmatpush1.bf16.msra.mxu0 %v1864
    %2017 = vmatprep.subr.bf16.mxu0 %v1895
    %2018 = vmatpush2.bf16.msra.mxu0 %v1894
    %2019 = vmatprep.subr.bf16.mxu0 %v1893
    %2020 = vmatpush2.bf16.msra.mxu0 %v1892
    %2021 = vmatprep.subr.bf16.mxu0 %v1891
    %2022 = vmatpush2.bf16.msra.mxu0 %v1890
    %2023 = vmatprep.subr.bf16.mxu0 %v1889
    %2024 = vmatpush2.bf16.msra.mxu0 %v1888
    %2025 = vmatprep.subr.bf16.mxu0 %v1887
    %2026 = vmatpush2.bf16.msra.mxu0 %v1886
    %2027 = vmatprep.subr.bf16.mxu0 %v1885
    %2028 = vmatpush2.bf16.msra.mxu0 %v1884
    %2029 = vmatprep.subr.bf16.mxu0 %v1883
    %2030 = vmatpush2.bf16.msra.mxu0 %v1882
    %2031 = vmatprep.subr.bf16.mxu0 %v1881
    %2032 = vmatpush2.bf16.msra.mxu0 %v1880
    %2033 = vmatprep.mubr.bf16.mxu0 %v1563
    %2034 = vmatmul.mubr.bf16.gmra.mxu0 %v1562
    %v2035 = vpop.f32.mrf.mxu0
    %v2036 = vadd.f32 %v1995, %v2035
    %v2037 = vpop.f32.mrf.mxu0
    %v2038 = vadd.f32 %v1997, %v2037
    %v2039 = vpop.f32.mrf.mxu0
    %v2040 = vpop.f32.mrf.mxu0
    %2041 = vdwg.mxu0
    %v2042 = vmax.f32 %v2036, 0.0
    %v2043 = vmax.f32 %v2038, 0.0
    %v2044 = vpack.c.bf16 %v2042, %v2042
    %v2045 = vpack.c.bf16 %v2043, %v2043
    %v2046 = vld [vmem:[#allocation10] sm:$0xf]
    %v2047 = vld [vmem:[#allocation10 + $0x4] sm:$0xf]
    %v2048 = vld [vmem:[#allocation10 + $0x8] sm:$0xf]
    %v2049 = vld [vmem:[#allocation10 + $0xc] sm:$0xf]
    %v2050 = vld [vmem:[#allocation10 + $0x10] sm:$0xf]
    %v2051 = vld [vmem:[#allocation10 + $0x14] sm:$0xf]
    %v2052 = vld [vmem:[#allocation10 + $0x18] sm:$0xf]
    %v2053 = vld [vmem:[#allocation10 + $0x1c] sm:$0xf]
    %v2054 = vld [vmem:[#allocation10 + $0x20] sm:$0xf]
    %v2055 = vld [vmem:[#allocation10 + $0x24] sm:$0xf]
    %v2056 = vld [vmem:[#allocation10 + $0x28] sm:$0xf]
    %v2057 = vld [vmem:[#allocation10 + $0x2c] sm:$0xf]
    %v2058 = vld [vmem:[#allocation10 + $0x30] sm:$0xf]
    %v2059 = vld [vmem:[#allocation10 + $0x34] sm:$0xf]
    %v2060 = vld [vmem:[#allocation10 + $0x38] sm:$0xf]
    %v2061 = vld [vmem:[#allocation10 + $0x3c] sm:$0xf]
    %v2062 = vld [vmem:[#allocation10 + $0x40] sm:$0xf]
    %v2063 = vld [vmem:[#allocation10 + $0x44] sm:$0xf]
    %v2064 = vld [vmem:[#allocation10 + $0x48] sm:$0xf]
    %v2065 = vld [vmem:[#allocation10 + $0x4c] sm:$0xf]
    %v2066 = vld [vmem:[#allocation10 + $0x50] sm:$0xf]
    %v2067 = vld [vmem:[#allocation10 + $0x54] sm:$0xf]
    %v2068 = vld [vmem:[#allocation10 + $0x58] sm:$0xf]
    %v2069 = vld [vmem:[#allocation10 + $0x5c] sm:$0xf]
    %v2070 = vld [vmem:[#allocation10 + $0x60] sm:$0xf]
    %v2071 = vld [vmem:[#allocation10 + $0x64] sm:$0xf]
    %v2072 = vld [vmem:[#allocation10 + $0x68] sm:$0xf]
    %v2073 = vld [vmem:[#allocation10 + $0x6c] sm:$0xf]
    %v2074 = vld [vmem:[#allocation10 + $0x70] sm:$0xf]
    %v2075 = vld [vmem:[#allocation10 + $0x74] sm:$0xf]
    %v2076 = vld [vmem:[#allocation10 + $0x78] sm:$0xf]
    %v2077 = vld [vmem:[#allocation10 + $0x7c] sm:$0xf]
    %v2078 = vld [vmem:[%s6] sm:$0x1]
    %v2080 = vlaneseq
    %v2081 = vshrl.u32 %v2080, 7
    %v2082 = vsub.s32 0, %v2081
    %v2083 = vrot.slane %v2078, %v2082
    %v2117 = vunpack.c.l.b16 %v2046
    %v2118 = vunpack.c.l.b16 %v2047
    %v2119 = vunpack.c.l.b16 %v2048
    %v2120 = vunpack.c.l.b16 %v2049
    %v2121 = vunpack.c.l.b16 %v2050
    %v2122 = vunpack.c.l.b16 %v2051
    %v2123 = vunpack.c.l.b16 %v2052
    %v2124 = vunpack.c.l.b16 %v2053
    %v2125 = vunpack.c.l.b16 %v2054
    %v2126 = vunpack.c.l.b16 %v2055
    %v2127 = vunpack.c.l.b16 %v2056
    %v2128 = vunpack.c.l.b16 %v2057
    %v2129 = vunpack.c.l.b16 %v2058
    %v2130 = vunpack.c.l.b16 %v2059
    %v2131 = vunpack.c.l.b16 %v2060
    %v2132 = vunpack.c.l.b16 %v2061
    %v2133 = vunpack.c.l.b16 %v2062
    %v2134 = vunpack.c.l.b16 %v2063
    %v2135 = vunpack.c.l.b16 %v2064
    %v2136 = vunpack.c.l.b16 %v2065
    %v2137 = vunpack.c.l.b16 %v2066
    %v2138 = vunpack.c.l.b16 %v2067
    %v2139 = vunpack.c.l.b16 %v2068
    %v2140 = vunpack.c.l.b16 %v2069
    %v2141 = vunpack.c.l.b16 %v2070
    %v2142 = vunpack.c.l.b16 %v2071
    %v2143 = vunpack.c.l.b16 %v2072
    %v2144 = vunpack.c.l.b16 %v2073
    %v2145 = vunpack.c.l.b16 %v2074
    %v2146 = vunpack.c.l.b16 %v2075
    %v2147 = vunpack.c.l.b16 %v2076
    %v2148 = vunpack.c.l.b16 %v2077
    %v2149 = vpack.c.b16 %v2118, %v2117
    %v2150 = vpack.c.b16 %v2120, %v2119
    %v2151 = vpack.c.b16 %v2122, %v2121
    %v2152 = vpack.c.b16 %v2124, %v2123
    %v2153 = vpack.c.b16 %v2126, %v2125
    %v2154 = vpack.c.b16 %v2128, %v2127
    %v2155 = vpack.c.b16 %v2130, %v2129
    %v2156 = vpack.c.b16 %v2132, %v2131
    %v2157 = vpack.c.b16 %v2134, %v2133
    %v2158 = vpack.c.b16 %v2136, %v2135
    %v2159 = vpack.c.b16 %v2138, %v2137
    %v2160 = vpack.c.b16 %v2140, %v2139
    %v2161 = vpack.c.b16 %v2142, %v2141
    %v2162 = vpack.c.b16 %v2144, %v2143
    %v2163 = vpack.c.b16 %v2146, %v2145
    %v2164 = vpack.c.b16 %v2148, %v2147
    %2181 = vmatprep.subr.bf16.mxu0 0
    %2182 = vmatpush1.bf16.msra.mxu0 %v2156
    %2183 = vmatprep.subr.bf16.mxu0 0
    %2184 = vmatpush1.bf16.msra.mxu0 %v2155
    %2185 = vmatprep.subr.bf16.mxu0 0
    %2186 = vmatpush1.bf16.msra.mxu0 %v2154
    %2187 = vmatprep.subr.bf16.mxu0 0
    %2188 = vmatpush1.bf16.msra.mxu0 %v2153
    %2189 = vmatprep.subr.bf16.mxu0 0
    %2190 = vmatpush1.bf16.msra.mxu0 %v2152
    %2191 = vmatprep.subr.bf16.mxu0 0
    %2192 = vmatpush1.bf16.msra.mxu0 %v2151
    %2193 = vmatprep.subr.bf16.mxu0 0
    %2194 = vmatpush1.bf16.msra.mxu0 %v2150
    %2195 = vmatprep.subr.bf16.mxu0 0
    %2196 = vmatpush1.bf16.msra.mxu0 %v2149
    %2197 = vmatprep.subr.bf16.mxu0 0
    %2198 = vmatpush2.bf16.msra.mxu0 %v2164
    %2199 = vmatprep.subr.bf16.mxu0 0
    %2200 = vmatpush2.bf16.msra.mxu0 %v2163
    %2201 = vmatprep.subr.bf16.mxu0 0
    %2202 = vmatpush2.bf16.msra.mxu0 %v2162
    %2203 = vmatprep.subr.bf16.mxu0 0
    %2204 = vmatpush2.bf16.msra.mxu0 %v2161
    %2205 = vmatprep.subr.bf16.mxu0 0
    %2206 = vmatpush2.bf16.msra.mxu0 %v2160
    %2207 = vmatprep.subr.bf16.mxu0 0
    %2208 = vmatpush2.bf16.msra.mxu0 %v2159
    %2209 = vmatprep.subr.bf16.mxu0 0
    %2210 = vmatpush2.bf16.msra.mxu0 %v2158
    %2211 = vmatprep.subr.bf16.mxu0 0
    %2212 = vmatpush2.bf16.msra.mxu0 %v2157
    %2213 = vmatprep.mubr.bf16.mxu0 %v2045
    %2214 = vmatmul.mubr.bf16.gmra.mxu0 %v2044
    %v2215 = vpop.f32.mrf.mxu0
    %v2216 = vadd.f32 %v2083, %v2215
    %v2217 = vpop.f32.mrf.mxu0
    %v2218 = vpop.f32.mrf.mxu0
    %v2219 = vpop.f32.mrf.mxu0
    %2220 = vdwg.mxu0
    %v2221 = vmax.f32 %v2216, 0.0
    %v2222 = vpack.c.bf16 %v2221, %v2221
    %v2223 = vld [vmem:[#allocation11] sm:$0xf]
    %v2224 = vld [vmem:[#allocation11 + $0x4] sm:$0xf]
    %v2225 = vld [vmem:[#allocation11 + $0x8] sm:$0xf]
    %v2226 = vld [vmem:[#allocation11 + $0xc] sm:$0xf]
    %v2227 = vld [vmem:[#allocation11 + $0x10] sm:$0xf]
    %v2228 = vld [vmem:[#allocation11 + $0x14] sm:$0xf]
    %v2229 = vld [vmem:[#allocation11 + $0x18] sm:$0xf]
    %v2230 = vld [vmem:[#allocation11 + $0x1c] sm:$0xf]
    %v2231 = vld [vmem:[#allocation11 + $0x20] sm:$0xf]
    %v2232 = vld [vmem:[#allocation11 + $0x24] sm:$0xf]
    %v2233 = vld [vmem:[#allocation11 + $0x28] sm:$0xf]
    %v2234 = vld [vmem:[#allocation11 + $0x2c] sm:$0xf]
    %v2235 = vld [vmem:[#allocation11 + $0x30] sm:$0xf]
    %v2236 = vld [vmem:[#allocation11 + $0x34] sm:$0xf]
    %v2237 = vld [vmem:[#allocation11 + $0x38] sm:$0xf]
    %v2238 = vld [vmem:[#allocation11 + $0x3c] sm:$0xf]
    %v2239 = vld [vmem:[%s8] sm:$0x1]
    %v2241 = vlaneseq
    %v2242 = vshrl.u32 %v2241, 7
    %v2243 = vsub.s32 0, %v2242
    %v2244 = vrot.slane %v2239, %v2243
    %v2262 = vunpack.c.l.b16 %v2223
    %v2263 = vunpack.c.l.b16 %v2224
    %v2264 = vunpack.c.l.b16 %v2225
    %v2265 = vunpack.c.l.b16 %v2226
    %v2266 = vunpack.c.l.b16 %v2227
    %v2267 = vunpack.c.l.b16 %v2228
    %v2268 = vunpack.c.l.b16 %v2229
    %v2269 = vunpack.c.l.b16 %v2230
    %v2270 = vunpack.c.l.b16 %v2231
    %v2271 = vunpack.c.l.b16 %v2232
    %v2272 = vunpack.c.l.b16 %v2233
    %v2273 = vunpack.c.l.b16 %v2234
    %v2274 = vunpack.c.l.b16 %v2235
    %v2275 = vunpack.c.l.b16 %v2236
    %v2276 = vunpack.c.l.b16 %v2237
    %v2277 = vunpack.c.l.b16 %v2238
    %v2278 = vpack.c.b16 %v2263, %v2262
    %v2279 = vpack.c.b16 %v2265, %v2264
    %v2280 = vpack.c.b16 %v2267, %v2266
    %v2281 = vpack.c.b16 %v2269, %v2268
    %v2282 = vpack.c.b16 %v2271, %v2270
    %v2283 = vpack.c.b16 %v2273, %v2272
    %v2284 = vpack.c.b16 %v2275, %v2274
    %v2285 = vpack.c.b16 %v2277, %v2276
    %2294 = vmatprep.subr.bf16.mxu0 0
    %2295 = vmatpush1.bf16.msra.mxu0 %v2285
    %2296 = vmatprep.subr.bf16.mxu0 0
    %2297 = vmatpush1.bf16.msra.mxu0 %v2284
    %2298 = vmatprep.subr.bf16.mxu0 0
    %2299 = vmatpush1.bf16.msra.mxu0 %v2283
    %2300 = vmatprep.subr.bf16.mxu0 0
    %2301 = vmatpush1.bf16.msra.mxu0 %v2282
    %2302 = vmatprep.subr.bf16.mxu0 0
    %2303 = vmatpush1.bf16.msra.mxu0 %v2281
    %2304 = vmatprep.subr.bf16.mxu0 0
    %2305 = vmatpush1.bf16.msra.mxu0 %v2280
    %2306 = vmatprep.subr.bf16.mxu0 0
    %2307 = vmatpush1.bf16.msra.mxu0 %v2279
    %2308 = vmatprep.subr.bf16.mxu0 0
    %2309 = vmatpush1.bf16.msra.mxu0 %v2278
    %2310 = vmatprep.subr.bf16.mxu0 0
    %2311 = vmatpush2.bf16.msra.mxu0 0
    %2312 = vmatprep.subr.bf16.mxu0 0
    %2313 = vmatpush2.bf16.msra.mxu0 0
    %2314 = vmatprep.subr.bf16.mxu0 0
    %2315 = vmatpush2.bf16.msra.mxu0 0
    %2316 = vmatprep.subr.bf16.mxu0 0
    %2317 = vmatpush2.bf16.msra.mxu0 0
    %2318 = vmatprep.subr.bf16.mxu0 0
    %2319 = vmatpush2.bf16.msra.mxu0 0
    %2320 = vmatprep.subr.bf16.mxu0 0
    %2321 = vmatpush2.bf16.msra.mxu0 0
    %2322 = vmatprep.subr.bf16.mxu0 0
    %2323 = vmatpush2.bf16.msra.mxu0 0
    %2324 = vmatprep.subr.bf16.mxu0 0
    %2325 = vmatpush2.bf16.msra.mxu0 0
    %2326 = vmatprep.mubr.bf16.mxu0 0
    %2327 = vmatmul.mubr.bf16.gmra.mxu0 %v2222
    %v2328 = vpop.f32.mrf.mxu0
    %v2329 = vadd.f32 %v2244, %v2328
    %v2330 = vpop.f32.mrf.mxu0
    %v2331 = vpop.f32.mrf.mxu0
    %v2332 = vpop.f32.mrf.mxu0
    %2333 = vdwg.mxu0
    %2334 = vst [vmem:[#allocation13] sm:$0xff] %v2329
    // Predicated region
    $region62: #{tpu_custom_call.1} parent=1 // pred_check
      _
    $region63: #{tpu_custom_call.1} parent=1 // pred_check_branch
      %2336 = sbr.rel (0) target = $region65
    $region64: #{tpu_custom_call.1} parent=1 // pred_region
      %s2338 = ssub.s32 128, 128
      %2339 = vsyncadd [#allocation4], %s2338
      %s2341 = sshll.u32 [#allocation13], 4
      %s2342 = int_to_ptr.vmem [resolvable:$true] %s2341
      %2344 = dma.vmem_to_hbm [thread:$0]  %s2342, 128, %s9, [#allocation4]
    $region65: #{tpu_custom_call.1} parent=1 // pred_fallthru
      _
    // Predicated region
    $region66: #{tpu_custom_call.1} parent=1 // pred_check
      _
    $region67: #{tpu_custom_call.1} parent=1 // pred_check_branch
      %2346 = sbr.rel (0) target = $region69
    $region68: #{tpu_custom_call.1} parent=1 // pred_region
      %2347 = dma.done [#allocation4], 128
    $region69: #{tpu_custom_call.1} parent=1 // pred_fallthru
      _
    %2348 = vsyncpa [#allocation3], 1
    %2349 = vsyncpa [#allocation6], 1
    %2350 = vsyncpa [#allocation9], 1
    %2351 = vsyncpa [#allocation12], 1
    %2352 = vsyncpa [#allocation4], 1

</llo_original>
